<compile_context>
chip_gen: v6e
topology: v6e:2x2x1
jax: 0.10.0
libtpu: 0.0.40
codegen_flags: <defaults>
</compile_context>

<pallas_src>
import functools

import jax
import jax.numpy as jnp
from jax.experimental import pallas as pl
from jax.experimental.pallas import tpu as pltpu


def cbam_kernel(x_ref, w1t_ref, w2_ref, wc_ref, out_ref, *, H, W):
    """One grid step: Bt batch elements.

    x_ref/out_ref : (Bt, C, H*W) VMEM block (lane-dense, H*W on lanes)
    w1t_ref       : (Cr, C, 1) VMEM = Linear1 weight (transposed), C on sublanes
    w2_ref        : (Cr, C, 1) VMEM = Linear2 weight, C on sublanes
    wc_ref        : (98,) SMEM = 7x7 conv weights, index ci*49 + ky*7 + kx
    """
    x = x_ref[...].astype(jnp.float32)                            # (Bt, C, HW)
    Bt, C, HW = x.shape
    Cr = w1t_ref.shape[0]

    # ---- channel attention: spatial avg/max pooling (lane reductions) ----
    y_avg = jnp.sum(x, axis=-1, keepdims=True) * (1.0 / float(HW))  # (Bt, C, 1)
    y_max = jnp.max(x, axis=-1, keepdims=True)                      # (Bt, C, 1)

    # Shared excitation MLP on the VPU: a (2,C)@(C,Cr) matmul is far too small
    # for the MXU, so do Cr (= C//r) sublane reductions instead.
    w1t = w1t_ref[...].astype(jnp.float32)                        # (Cr, C, 1)
    w2 = w2_ref[...].astype(jnp.float32)                          # (Cr, C, 1)
    z_avg = jnp.zeros((Bt, C, 1), jnp.float32)
    z_max = jnp.zeros((Bt, C, 1), jnp.float32)
    for j in range(Cr):
        w1j = w1t[j][None]                                        # (1, C, 1)
        w2j = w2[j][None]                                         # (1, C, 1)
        h_avg = jnp.maximum(
            jnp.sum(y_avg * w1j, axis=1, keepdims=True), 0.0)     # (Bt, 1, 1)
        h_max = jnp.maximum(
            jnp.sum(y_max * w1j, axis=1, keepdims=True), 0.0)
        z_avg = z_avg + h_avg * w2j                               # (Bt, C, 1)
        z_max = z_max + h_max * w2j

    ca = jax.nn.sigmoid(z_avg + z_max)                            # (Bt, C, 1)
    xc = x * ca                                # channel gating: lane broadcast

    # ---- spatial attention: channel mean/max -> 7x7 conv -> sigmoid ----
    sa_avg = jnp.mean(xc, axis=1)                                 # (Bt, HW)
    sa_max = jnp.max(xc, axis=1)                                  # (Bt, HW)

    # Column (x) coordinate of each lane in the flattened H*W layout, used to
    # zero out dx shifts that cross a row boundary.
    lane = jax.lax.broadcasted_iota(jnp.int32, (1, HW), 1)
    xcol = lane % W

    def build_cols(flat):
        """For each of the 7 dx offsets: x-shifted, x-zero-padded map, then
        zero-padded by 3*W lanes on both sides so every dy tap is a plain
        static lane slice (the zero pad supplies the out-of-image rows)."""
        p3 = jnp.pad(flat, ((0, 0), (3, 3)))                      # (Bt, HW+6)
        cols = []
        for dx in range(7):
            ddx = dx - 3
            shifted = p3[:, dx:dx + HW]                           # flat[p+ddx]
            if ddx > 0:
                shifted = jnp.where(xcol < (W - ddx), shifted, 0.0)
            elif ddx < 0:
                shifted = jnp.where(xcol >= (-ddx), shifted, 0.0)
            cols.append(jnp.pad(shifted, ((0, 0), (3 * W, 3 * W))))
        return cols                                               # 7x(Bt,HW+6W)

    col_a = build_cols(sa_avg)
    col_m = build_cols(sa_max)

    # 7x7 cross-correlation, 2 input channels -> 1 output channel, pad=3,
    # no bias.  dx shifts hoisted above; 4 partial accumulators for VALU ILP.
    accs = [jnp.zeros((Bt, HW), jnp.float32) for _ in range(4)]
    t = 0
    for dy in range(7):
        o = dy * W
        for dx in range(7):
            wa = wc_ref[dy * 7 + dx]                  # scalar (avg channel)
            wm = wc_ref[49 + dy * 7 + dx]             # scalar (max channel)
            tap = wa * col_a[dx][:, o:o + HW] + wm * col_m[dx][:, o:o + HW]
            accs[t & 3] = accs[t & 3] + tap
            t += 1
    conv = (accs[0] + accs[1]) + (accs[2] + accs[3])              # (Bt, HW)

    sa = jax.nn.sigmoid(conv)[:, None, :]                         # (Bt, 1, HW)
    out_ref[...] = (xc * sa).astype(out_ref.dtype)


def _pick_block_batch(B, per_elem_bytes, vmem_budget_bytes=8 << 20, min_grid=2):
    """Batch elements per grid step: big enough to amortize the ~0.35us
    per-step overhead, small enough that the double-buffered (in + out)
    blocks stay well inside the scoped VMEM budget (64 MiB physical on v7x),
    while keeping >= 2 grid steps so both v7x TensorCores get work."""
    cap = max(1, vmem_budget_bytes // (4 * per_elem_bytes))
    bt = max(1, min(B, cap))
    if B >= min_grid:
        bt = min(bt, max(1, B // min_grid))
    while B % bt:
        bt -= 1
    return bt


def cbam_pallas(x, w1, w2, wconv):
    """x: (B, C, H, W); w1: (C, Cr); w2: (Cr, C); wconv: (2, 7, 7)."""
    B, C, H, W = x.shape
    Cr = w1.shape[1]
    HW = H * W

    # Lane-dense re-layout (contiguous, essentially free in the wrapper).
    x3 = x.reshape(B, C, HW)
    # Weights with C on the sublane axis so the MLP / channel gating never
    # needs a lane<->sublane relayout of the (C,) channel vectors.
    w1t3 = jnp.transpose(w1)[:, :, None].astype(jnp.float32)      # (Cr, C, 1)
    w2_3 = w2[:, :, None].astype(jnp.float32)                     # (Cr, C, 1)
    wconv_flat = wconv.reshape(-1).astype(jnp.float32)            # (98,) SMEM

    bt = _pick_block_batch(B, per_elem_bytes=C * HW * x.dtype.itemsize)

    kernel = functools.partial(cbam_kernel, H=H, W=W)
    out3 = pl.pallas_call(
        kernel,
        out_shape=jax.ShapeDtypeStruct((B, C, HW), x.dtype),
        grid_spec=pltpu.PrefetchScalarGridSpec(
            num_scalar_prefetch=0,
            grid=(B // bt,),
            in_specs=[
                pl.BlockSpec((bt, C, HW), lambda b: (b, 0, 0)),
                pl.BlockSpec((Cr, C, 1), lambda b: (0, 0, 0)),
                pl.BlockSpec((Cr, C, 1), lambda b: (0, 0, 0)),
                pl.BlockSpec(memory_space=pltpu.MemorySpace.SMEM),
            ],
            out_specs=pl.BlockSpec((bt, C, HW), lambda b: (b, 0, 0)),
        ),
        compiler_params=pltpu.CompilerParams(
            dimension_semantics=("parallel",),
            vmem_limit_bytes=32 * 1024 * 1024),
    )(x3, w1t3, w2_3, wconv_flat)
    return out3.reshape(B, C, H, W)


def cbam_ref(x, w1, w2, wconv):
    """Pure-JAX reference matching the PyTorch forward semantics."""
    y_avg = jnp.mean(x, axis=(2, 3))                              # (B, C)
    y_max = jnp.max(x, axis=(2, 3))                               # (B, C)

    def mlp(y):
        return jnp.maximum(y @ w1, 0.0) @ w2

    ca = jax.nn.sigmoid(mlp(y_avg) + mlp(y_max))                  # (B, C)
    xc = x * ca[:, :, None, None]

    sa_avg = jnp.mean(xc, axis=1, keepdims=True)                  # (B,1,H,W)
    sa_max = jnp.max(xc, axis=1, keepdims=True)                   # (B,1,H,W)
    sp = jnp.concatenate([sa_avg, sa_max], axis=1)                # (B,2,H,W)
    conv = jax.lax.conv_general_dilated(
        sp, wconv[None], window_strides=(1, 1), padding=((3, 3), (3, 3)),
        dimension_numbers=("NCHW", "OIHW", "NCHW"))               # (B,1,H,W)
    sa = jax.nn.sigmoid(conv)
    return xc * sa


if __name__ == "__main__":
    B, C, H, W = 2, 32, 16, 16
    r = 16
    Cr = C // r  # 2

    key = jax.random.PRNGKey(0)
    kx, k1, k2, k3 = jax.random.split(key, 4)
    x = jax.random.normal(kx, (B, C, H, W), jnp.float32)
    # excitation MLP params (no bias): w1 = Linear1.weight.T, w2 = Linear2.weight.T
    w1 = jax.random.normal(k1, (C, Cr), jnp.float32) * 0.1
    w2 = jax.random.normal(k2, (Cr, C), jnp.float32) * 0.1
    # 7x7 conv weight for 2 input channels, 1 output channel, no bias
    wconv = jax.random.normal(k3, (2, 7, 7), jnp.float32) * 0.05

    out = cbam_pallas(x, w1, w2, wconv)
    out = jax.block_until_ready(out)

    ref = cbam_ref(x, w1, w2, wconv)
    assert out.shape == (B, C, H, W)
    assert jnp.allclose(out, ref, rtol=1e-5, atol=1e-5), "mismatch vs reference"

    print("KERNEL_OK")
</pallas_src>

<mosaic_0001>
module attributes {stable_mosaic.version = 11 : i64} {
  func.func @cbam_kernel(%arg0: i32, %arg1: memref<1x32x256xf32, #tpu.memory_space<vmem>>, %arg2: memref<2x32x1xf32, #tpu.memory_space<vmem>>, %arg3: memref<2x32x1xf32, #tpu.memory_space<vmem>>, %arg4: memref<98xf32, #tpu.memory_space<smem>>, %arg5: memref<1x32x256xf32, #tpu.memory_space<vmem>>) attributes {dimension_semantics = [#tpu.dimension_semantics<parallel>], iteration_bounds = array<i64: 2>, scalar_prefetch = 0 : i64, scratch_operands = 0 : i64, tpu.core_type = #tpu.core_type<tc>, window_params = [{transform_indices = @transform_0, window_bounds = array<i64: 1, 32, 256>}, {pipeline_mode = #tpu.pipeline_mode<synchronous>, transform_indices = @transform_1, window_bounds = array<i64: 2, 32, 1>}, {pipeline_mode = #tpu.pipeline_mode<synchronous>, transform_indices = @transform_2, window_bounds = array<i64: 2, 32, 1>}, {transform_indices = @transform_3, window_bounds = array<i64: 98>}, {transform_indices = @transform_4, window_bounds = array<i64: 1, 32, 256>}]} {
    %c0 = arith.constant 0 : index
    %c0_0 = arith.constant 0 : index
    %c0_1 = arith.constant 0 : index
    %0 = vector.load %arg1[%c0, %c0_0, %c0_1] : memref<1x32x256xf32, #tpu.memory_space<vmem>>, vector<1x32x256xf32>
    %cst = arith.constant dense<0.000000e+00> : vector<1x32xf32>
    %1 = vector.multi_reduction <add>, %0, %cst [2] : vector<1x32x256xf32> to vector<1x32xf32>
    %2 = vector.shape_cast %1 : vector<1x32xf32> to vector<1x32x1xf32>
    %cst_2 = arith.constant 3.906250e-03 : f32
    %3 = vector.broadcast %cst_2 : f32 to vector<1x32x1xf32>
    %4 = arith.mulf %2, %3 : vector<1x32x1xf32>
    %cst_3 = arith.constant dense<0xFF800000> : vector<1x32xf32>
    %5 = vector.multi_reduction <maximumf>, %0, %cst_3 [2] : vector<1x32x256xf32> to vector<1x32xf32>
    %6 = vector.shape_cast %5 : vector<1x32xf32> to vector<1x32x1xf32>
    %c0_4 = arith.constant 0 : index
    %c0_5 = arith.constant 0 : index
    %c0_6 = arith.constant 0 : index
    %7 = vector.load %arg2[%c0_4, %c0_5, %c0_6] : memref<2x32x1xf32, #tpu.memory_space<vmem>>, vector<2x32x1xf32>
    %c0_7 = arith.constant 0 : index
    %c0_8 = arith.constant 0 : index
    %c0_9 = arith.constant 0 : index
    %8 = vector.load %arg3[%c0_7, %c0_8, %c0_9] : memref<2x32x1xf32, #tpu.memory_space<vmem>>, vector<2x32x1xf32>
    %cst_10 = arith.constant 0.000000e+00 : f32
    %9 = vector.broadcast %cst_10 : f32 to vector<1x32x1xf32>
    %cst_11 = arith.constant 0.000000e+00 : f32
    %10 = vector.broadcast %cst_11 : f32 to vector<1x32x1xf32>
    %11 = vector.extract_strided_slice %7 {offsets = [0, 0, 0], sizes = [1, 32, 1], strides = [1, 1, 1]} : vector<2x32x1xf32> to vector<1x32x1xf32>
    %12 = vector.shape_cast %11 : vector<1x32x1xf32> to vector<32x1xf32>
    %13 = vector.shape_cast %12 : vector<32x1xf32> to vector<1x32x1xf32>
    %14 = vector.extract_strided_slice %8 {offsets = [0, 0, 0], sizes = [1, 32, 1], strides = [1, 1, 1]} : vector<2x32x1xf32> to vector<1x32x1xf32>
    %15 = vector.shape_cast %14 : vector<1x32x1xf32> to vector<32x1xf32>
    %16 = vector.shape_cast %15 : vector<32x1xf32> to vector<1x32x1xf32>
    %17 = arith.mulf %4, %13 : vector<1x32x1xf32>
    %cst_12 = arith.constant dense<0.000000e+00> : vector<1x1xf32>
    %18 = vector.multi_reduction <add>, %17, %cst_12 [1] : vector<1x32x1xf32> to vector<1x1xf32>
    %19 = vector.shape_cast %18 : vector<1x1xf32> to vector<1x1x1xf32>
    %cst_13 = arith.constant 0.000000e+00 : f32
    %20 = vector.broadcast %cst_13 : f32 to vector<1x1x1xf32>
    %21 = arith.maximumf %19, %20 : vector<1x1x1xf32>
    %22 = arith.mulf %6, %13 : vector<1x32x1xf32>
    %cst_14 = arith.constant dense<0.000000e+00> : vector<1x1xf32>
    %23 = vector.multi_reduction <add>, %22, %cst_14 [1] : vector<1x32x1xf32> to vector<1x1xf32>
    %24 = vector.shape_cast %23 : vector<1x1xf32> to vector<1x1x1xf32>
    %cst_15 = arith.constant 0.000000e+00 : f32
    %25 = vector.broadcast %cst_15 : f32 to vector<1x1x1xf32>
    %26 = arith.maximumf %24, %25 : vector<1x1x1xf32>
    %27 = vector.broadcast %21 : vector<1x1x1xf32> to vector<1x32x1xf32>
    %28 = arith.mulf %27, %16 : vector<1x32x1xf32>
    %29 = arith.addf %9, %28 : vector<1x32x1xf32>
    %30 = vector.broadcast %26 : vector<1x1x1xf32> to vector<1x32x1xf32>
    %31 = arith.mulf %30, %16 : vector<1x32x1xf32>
    %32 = arith.addf %10, %31 : vector<1x32x1xf32>
    %33 = vector.extract_strided_slice %7 {offsets = [1, 0, 0], sizes = [1, 32, 1], strides = [1, 1, 1]} : vector<2x32x1xf32> to vector<1x32x1xf32>
    %34 = vector.shape_cast %33 : vector<1x32x1xf32> to vector<32x1xf32>
    %35 = vector.shape_cast %34 : vector<32x1xf32> to vector<1x32x1xf32>
    %36 = vector.extract_strided_slice %8 {offsets = [1, 0, 0], sizes = [1, 32, 1], strides = [1, 1, 1]} : vector<2x32x1xf32> to vector<1x32x1xf32>
    %37 = vector.shape_cast %36 : vector<1x32x1xf32> to vector<32x1xf32>
    %38 = vector.shape_cast %37 : vector<32x1xf32> to vector<1x32x1xf32>
    %39 = arith.mulf %4, %35 : vector<1x32x1xf32>
    %cst_16 = arith.constant dense<0.000000e+00> : vector<1x1xf32>
    %40 = vector.multi_reduction <add>, %39, %cst_16 [1] : vector<1x32x1xf32> to vector<1x1xf32>
    %41 = vector.shape_cast %40 : vector<1x1xf32> to vector<1x1x1xf32>
    %cst_17 = arith.constant 0.000000e+00 : f32
    %42 = vector.broadcast %cst_17 : f32 to vector<1x1x1xf32>
    %43 = arith.maximumf %41, %42 : vector<1x1x1xf32>
    %44 = arith.mulf %6, %35 : vector<1x32x1xf32>
    %cst_18 = arith.constant dense<0.000000e+00> : vector<1x1xf32>
    %45 = vector.multi_reduction <add>, %44, %cst_18 [1] : vector<1x32x1xf32> to vector<1x1xf32>
    %46 = vector.shape_cast %45 : vector<1x1xf32> to vector<1x1x1xf32>
    %cst_19 = arith.constant 0.000000e+00 : f32
    %47 = vector.broadcast %cst_19 : f32 to vector<1x1x1xf32>
    %48 = arith.maximumf %46, %47 : vector<1x1x1xf32>
    %49 = vector.broadcast %43 : vector<1x1x1xf32> to vector<1x32x1xf32>
    %50 = arith.mulf %49, %38 : vector<1x32x1xf32>
    %51 = arith.addf %29, %50 : vector<1x32x1xf32>
    %52 = vector.broadcast %48 : vector<1x1x1xf32> to vector<1x32x1xf32>
    %53 = arith.mulf %52, %38 : vector<1x32x1xf32>
    %54 = arith.addf %32, %53 : vector<1x32x1xf32>
    %55 = arith.addf %51, %54 : vector<1x32x1xf32>
    %56 = arith.negf %55 : vector<1x32x1xf32>
    %57 = math.exp %56 : vector<1x32x1xf32>
    %cst_20 = arith.constant 1.000000e+00 : f32
    %58 = vector.broadcast %cst_20 : f32 to vector<1x32x1xf32>
    %59 = arith.addf %58, %57 : vector<1x32x1xf32>
    %60 = arith.divf %58, %59 : vector<1x32x1xf32>
    %61 = vector.broadcast %60 : vector<1x32x1xf32> to vector<1x32x256xf32>
    %62 = arith.mulf %0, %61 : vector<1x32x256xf32>
    %cst_21 = arith.constant dense<0.000000e+00> : vector<1x256xf32>
    %63 = vector.multi_reduction <add>, %62, %cst_21 [1] : vector<1x32x256xf32> to vector<1x256xf32>
    %cst_22 = arith.constant 3.200000e+01 : f32
    %64 = vector.broadcast %cst_22 : f32 to vector<1x256xf32>
    %65 = arith.divf %63, %64 : vector<1x256xf32>
    %cst_23 = arith.constant dense<0xFF800000> : vector<1x256xf32>
    %66 = vector.multi_reduction <maximumf>, %62, %cst_23 [1] : vector<1x32x256xf32> to vector<1x256xf32>
    %67 = tpu.iota {dimensions = array<i32: 1>} : vector<1x256xi32>
    %c16_i32 = arith.constant 16 : i32
    %c0_i32 = arith.constant 0 : i32
    %68 = arith.cmpi eq, %c16_i32, %c0_i32 : i32
    %c1_i32 = arith.constant 1 : i32
    %69 = arith.select %68, %c1_i32, %c16_i32 : i32
    %70 = vector.broadcast %69 : i32 to vector<1x256xi32>
    %71 = arith.remsi %67, %70 : vector<1x256xi32>
    %c0_i32_24 = arith.constant 0 : i32
    %72 = vector.broadcast %c0_i32_24 : i32 to vector<1x256xi32>
    %73 = arith.cmpi ne, %71, %72 : vector<1x256xi32>
    %c0_i32_25 = arith.constant 0 : i32
    %74 = vector.broadcast %c0_i32_25 : i32 to vector<1x256xi32>
    %75 = arith.cmpi slt, %71, %74 : vector<1x256xi32>
    %c0_i32_26 = arith.constant 0 : i32
    %76 = arith.cmpi slt, %69, %c0_i32_26 : i32
    %77 = vector.broadcast %76 : i1 to vector<1x256xi1>
    %78 = vector.broadcast %77 : vector<1x256xi1> to vector<1x256xi1>
    %79 = arith.xori %75, %78 : vector<1x256xi1>
    %80 = arith.andi %79, %73 : vector<1x256xi1>
    %81 = vector.broadcast %69 : i32 to vector<1x256xi32>
    %82 = arith.addi %71, %81 : vector<1x256xi32>
    %83 = arith.select %80, %82, %71 : vector<1x256xi1>, vector<1x256xi32>
    %c0_i32_27 = arith.constant 0 : i32
    %84 = arith.sitofp %c0_i32_27 : i32 to f32
    %85 = vector.broadcast %84 : f32 to vector<1x3xf32>
    %86 = tpu.concatenate %85, %65 in 1 : vector<1x3xf32>, vector<1x256xf32> -> vector<1x259xf32>
    %87 = vector.broadcast %84 : f32 to vector<1x3xf32>
    %88 = tpu.concatenate %86, %87 in 1 : vector<1x259xf32>, vector<1x3xf32> -> vector<1x262xf32>
    %89 = vector.extract_strided_slice %88 {offsets = [0, 0], sizes = [1, 256], strides = [1, 1]} : vector<1x262xf32> to vector<1x256xf32>
    %c3_i32 = arith.constant 3 : i32
    %90 = vector.broadcast %c3_i32 : i32 to vector<1x256xi32>
    %91 = arith.cmpi sge, %83, %90 : vector<1x256xi32>
    %cst_28 = arith.constant 0.000000e+00 : f32
    %92 = vector.broadcast %cst_28 : f32 to vector<1x256xf32>
    %93 = arith.select %91, %89, %92 : vector<1x256xi1>, vector<1x256xf32>
    %c0_i32_29 = arith.constant 0 : i32
    %94 = arith.sitofp %c0_i32_29 : i32 to f32
    %95 = vector.broadcast %94 : f32 to vector<1x48xf32>
    %96 = tpu.concatenate %95, %93 in 1 : vector<1x48xf32>, vector<1x256xf32> -> vector<1x304xf32>
    %97 = vector.broadcast %94 : f32 to vector<1x48xf32>
    %98 = tpu.concatenate %96, %97 in 1 : vector<1x304xf32>, vector<1x48xf32> -> vector<1x352xf32>
    %99 = vector.extract_strided_slice %88 {offsets = [0, 1], sizes = [1, 256], strides = [1, 1]} : vector<1x262xf32> to vector<1x256xf32>
    %c2_i32 = arith.constant 2 : i32
    %100 = vector.broadcast %c2_i32 : i32 to vector<1x256xi32>
    %101 = arith.cmpi sge, %83, %100 : vector<1x256xi32>
    %cst_30 = arith.constant 0.000000e+00 : f32
    %102 = vector.broadcast %cst_30 : f32 to vector<1x256xf32>
    %103 = arith.select %101, %99, %102 : vector<1x256xi1>, vector<1x256xf32>
    %c0_i32_31 = arith.constant 0 : i32
    %104 = arith.sitofp %c0_i32_31 : i32 to f32
    %105 = vector.broadcast %104 : f32 to vector<1x48xf32>
    %106 = tpu.concatenate %105, %103 in 1 : vector<1x48xf32>, vector<1x256xf32> -> vector<1x304xf32>
    %107 = vector.broadcast %104 : f32 to vector<1x48xf32>
    %108 = tpu.concatenate %106, %107 in 1 : vector<1x304xf32>, vector<1x48xf32> -> vector<1x352xf32>
    %109 = vector.extract_strided_slice %88 {offsets = [0, 2], sizes = [1, 256], strides = [1, 1]} : vector<1x262xf32> to vector<1x256xf32>
    %c1_i32_32 = arith.constant 1 : i32
    %110 = vector.broadcast %c1_i32_32 : i32 to vector<1x256xi32>
    %111 = arith.cmpi sge, %83, %110 : vector<1x256xi32>
    %cst_33 = arith.constant 0.000000e+00 : f32
    %112 = vector.broadcast %cst_33 : f32 to vector<1x256xf32>
    %113 = arith.select %111, %109, %112 : vector<1x256xi1>, vector<1x256xf32>
    %c0_i32_34 = arith.constant 0 : i32
    %114 = arith.sitofp %c0_i32_34 : i32 to f32
    %115 = vector.broadcast %114 : f32 to vector<1x48xf32>
    %116 = tpu.concatenate %115, %113 in 1 : vector<1x48xf32>, vector<1x256xf32> -> vector<1x304xf32>
    %117 = vector.broadcast %114 : f32 to vector<1x48xf32>
    %118 = tpu.concatenate %116, %117 in 1 : vector<1x304xf32>, vector<1x48xf32> -> vector<1x352xf32>
    %119 = vector.extract_strided_slice %88 {offsets = [0, 3], sizes = [1, 256], strides = [1, 1]} : vector<1x262xf32> to vector<1x256xf32>
    %c0_i32_35 = arith.constant 0 : i32
    %120 = arith.sitofp %c0_i32_35 : i32 to f32
    %121 = vector.broadcast %120 : f32 to vector<1x48xf32>
    %122 = tpu.concatenate %121, %119 in 1 : vector<1x48xf32>, vector<1x256xf32> -> vector<1x304xf32>
    %123 = vector.broadcast %120 : f32 to vector<1x48xf32>
    %124 = tpu.concatenate %122, %123 in 1 : vector<1x304xf32>, vector<1x48xf32> -> vector<1x352xf32>
    %125 = vector.extract_strided_slice %88 {offsets = [0, 4], sizes = [1, 256], strides = [1, 1]} : vector<1x262xf32> to vector<1x256xf32>
    %c15_i32 = arith.constant 15 : i32
    %126 = vector.broadcast %c15_i32 : i32 to vector<1x256xi32>
    %127 = arith.cmpi slt, %83, %126 : vector<1x256xi32>
    %cst_36 = arith.constant 0.000000e+00 : f32
    %128 = vector.broadcast %cst_36 : f32 to vector<1x256xf32>
    %129 = arith.select %127, %125, %128 : vector<1x256xi1>, vector<1x256xf32>
    %c0_i32_37 = arith.constant 0 : i32
    %130 = arith.sitofp %c0_i32_37 : i32 to f32
    %131 = vector.broadcast %130 : f32 to vector<1x48xf32>
    %132 = tpu.concatenate %131, %129 in 1 : vector<1x48xf32>, vector<1x256xf32> -> vector<1x304xf32>
    %133 = vector.broadcast %130 : f32 to vector<1x48xf32>
    %134 = tpu.concatenate %132, %133 in 1 : vector<1x304xf32>, vector<1x48xf32> -> vector<1x352xf32>
    %135 = vector.extract_strided_slice %88 {offsets = [0, 5], sizes = [1, 256], strides = [1, 1]} : vector<1x262xf32> to vector<1x256xf32>
    %c14_i32 = arith.constant 14 : i32
    %136 = vector.broadcast %c14_i32 : i32 to vector<1x256xi32>
    %137 = arith.cmpi slt, %83, %136 : vector<1x256xi32>
    %cst_38 = arith.constant 0.000000e+00 : f32
    %138 = vector.broadcast %cst_38 : f32 to vector<1x256xf32>
    %139 = arith.select %137, %135, %138 : vector<1x256xi1>, vector<1x256xf32>
    %c0_i32_39 = arith.constant 0 : i32
    %140 = arith.sitofp %c0_i32_39 : i32 to f32
    %141 = vector.broadcast %140 : f32 to vector<1x48xf32>
    %142 = tpu.concatenate %141, %139 in 1 : vector<1x48xf32>, vector<1x256xf32> -> vector<1x304xf32>
    %143 = vector.broadcast %140 : f32 to vector<1x48xf32>
    %144 = tpu.concatenate %142, %143 in 1 : vector<1x304xf32>, vector<1x48xf32> -> vector<1x352xf32>
    %145 = vector.extract_strided_slice %88 {offsets = [0, 6], sizes = [1, 256], strides = [1, 1]} : vector<1x262xf32> to vector<1x256xf32>
    %c13_i32 = arith.constant 13 : i32
    %146 = vector.broadcast %c13_i32 : i32 to vector<1x256xi32>
    %147 = arith.cmpi slt, %83, %146 : vector<1x256xi32>
    %cst_40 = arith.constant 0.000000e+00 : f32
    %148 = vector.broadcast %cst_40 : f32 to vector<1x256xf32>
    %149 = arith.select %147, %145, %148 : vector<1x256xi1>, vector<1x256xf32>
    %c0_i32_41 = arith.constant 0 : i32
    %150 = arith.sitofp %c0_i32_41 : i32 to f32
    %151 = vector.broadcast %150 : f32 to vector<1x48xf32>
    %152 = tpu.concatenate %151, %149 in 1 : vector<1x48xf32>, vector<1x256xf32> -> vector<1x304xf32>
    %153 = vector.broadcast %150 : f32 to vector<1x48xf32>
    %154 = tpu.concatenate %152, %153 in 1 : vector<1x304xf32>, vector<1x48xf32> -> vector<1x352xf32>
    %c0_i32_42 = arith.constant 0 : i32
    %155 = arith.sitofp %c0_i32_42 : i32 to f32
    %156 = vector.broadcast %155 : f32 to vector<1x3xf32>
    %157 = tpu.concatenate %156, %66 in 1 : vector<1x3xf32>, vector<1x256xf32> -> vector<1x259xf32>
    %158 = vector.broadcast %155 : f32 to vector<1x3xf32>
    %159 = tpu.concatenate %157, %158 in 1 : vector<1x259xf32>, vector<1x3xf32> -> vector<1x262xf32>
    %160 = vector.extract_strided_slice %159 {offsets = [0, 0], sizes = [1, 256], strides = [1, 1]} : vector<1x262xf32> to vector<1x256xf32>
    %c3_i32_43 = arith.constant 3 : i32
    %161 = vector.broadcast %c3_i32_43 : i32 to vector<1x256xi32>
    %162 = arith.cmpi sge, %83, %161 : vector<1x256xi32>
    %cst_44 = arith.constant 0.000000e+00 : f32
    %163 = vector.broadcast %cst_44 : f32 to vector<1x256xf32>
    %164 = arith.select %162, %160, %163 : vector<1x256xi1>, vector<1x256xf32>
    %c0_i32_45 = arith.constant 0 : i32
    %165 = arith.sitofp %c0_i32_45 : i32 to f32
    %166 = vector.broadcast %165 : f32 to vector<1x48xf32>
    %167 = tpu.concatenate %166, %164 in 1 : vector<1x48xf32>, vector<1x256xf32> -> vector<1x304xf32>
    %168 = vector.broadcast %165 : f32 to vector<1x48xf32>
    %169 = tpu.concatenate %167, %168 in 1 : vector<1x304xf32>, vector<1x48xf32> -> vector<1x352xf32>
    %170 = vector.extract_strided_slice %159 {offsets = [0, 1], sizes = [1, 256], strides = [1, 1]} : vector<1x262xf32> to vector<1x256xf32>
    %c2_i32_46 = arith.constant 2 : i32
    %171 = vector.broadcast %c2_i32_46 : i32 to vector<1x256xi32>
    %172 = arith.cmpi sge, %83, %171 : vector<1x256xi32>
    %cst_47 = arith.constant 0.000000e+00 : f32
    %173 = vector.broadcast %cst_47 : f32 to vector<1x256xf32>
    %174 = arith.select %172, %170, %173 : vector<1x256xi1>, vector<1x256xf32>
    %c0_i32_48 = arith.constant 0 : i32
    %175 = arith.sitofp %c0_i32_48 : i32 to f32
    %176 = vector.broadcast %175 : f32 to vector<1x48xf32>
    %177 = tpu.concatenate %176, %174 in 1 : vector<1x48xf32>, vector<1x256xf32> -> vector<1x304xf32>
    %178 = vector.broadcast %175 : f32 to vector<1x48xf32>
    %179 = tpu.concatenate %177, %178 in 1 : vector<1x304xf32>, vector<1x48xf32> -> vector<1x352xf32>
    %180 = vector.extract_strided_slice %159 {offsets = [0, 2], sizes = [1, 256], strides = [1, 1]} : vector<1x262xf32> to vector<1x256xf32>
    %c1_i32_49 = arith.constant 1 : i32
    %181 = vector.broadcast %c1_i32_49 : i32 to vector<1x256xi32>
    %182 = arith.cmpi sge, %83, %181 : vector<1x256xi32>
    %cst_50 = arith.constant 0.000000e+00 : f32
    %183 = vector.broadcast %cst_50 : f32 to vector<1x256xf32>
    %184 = arith.select %182, %180, %183 : vector<1x256xi1>, vector<1x256xf32>
    %c0_i32_51 = arith.constant 0 : i32
    %185 = arith.sitofp %c0_i32_51 : i32 to f32
    %186 = vector.broadcast %185 : f32 to vector<1x48xf32>
    %187 = tpu.concatenate %186, %184 in 1 : vector<1x48xf32>, vector<1x256xf32> -> vector<1x304xf32>
    %188 = vector.broadcast %185 : f32 to vector<1x48xf32>
    %189 = tpu.concatenate %187, %188 in 1 : vector<1x304xf32>, vector<1x48xf32> -> vector<1x352xf32>
    %190 = vector.extract_strided_slice %159 {offsets = [0, 3], sizes = [1, 256], strides = [1, 1]} : vector<1x262xf32> to vector<1x256xf32>
    %c0_i32_52 = arith.constant 0 : i32
    %191 = arith.sitofp %c0_i32_52 : i32 to f32
    %192 = vector.broadcast %191 : f32 to vector<1x48xf32>
    %193 = tpu.concatenate %192, %190 in 1 : vector<1x48xf32>, vector<1x256xf32> -> vector<1x304xf32>
    %194 = vector.broadcast %191 : f32 to vector<1x48xf32>
    %195 = tpu.concatenate %193, %194 in 1 : vector<1x304xf32>, vector<1x48xf32> -> vector<1x352xf32>
    %196 = vector.extract_strided_slice %159 {offsets = [0, 4], sizes = [1, 256], strides = [1, 1]} : vector<1x262xf32> to vector<1x256xf32>
    %c15_i32_53 = arith.constant 15 : i32
    %197 = vector.broadcast %c15_i32_53 : i32 to vector<1x256xi32>
    %198 = arith.cmpi slt, %83, %197 : vector<1x256xi32>
    %cst_54 = arith.constant 0.000000e+00 : f32
    %199 = vector.broadcast %cst_54 : f32 to vector<1x256xf32>
    %200 = arith.select %198, %196, %199 : vector<1x256xi1>, vector<1x256xf32>
    %c0_i32_55 = arith.constant 0 : i32
    %201 = arith.sitofp %c0_i32_55 : i32 to f32
    %202 = vector.broadcast %201 : f32 to vector<1x48xf32>
    %203 = tpu.concatenate %202, %200 in 1 : vector<1x48xf32>, vector<1x256xf32> -> vector<1x304xf32>
    %204 = vector.broadcast %201 : f32 to vector<1x48xf32>
    %205 = tpu.concatenate %203, %204 in 1 : vector<1x304xf32>, vector<1x48xf32> -> vector<1x352xf32>
    %206 = vector.extract_strided_slice %159 {offsets = [0, 5], sizes = [1, 256], strides = [1, 1]} : vector<1x262xf32> to vector<1x256xf32>
    %c14_i32_56 = arith.constant 14 : i32
    %207 = vector.broadcast %c14_i32_56 : i32 to vector<1x256xi32>
    %208 = arith.cmpi slt, %83, %207 : vector<1x256xi32>
    %cst_57 = arith.constant 0.000000e+00 : f32
    %209 = vector.broadcast %cst_57 : f32 to vector<1x256xf32>
    %210 = arith.select %208, %206, %209 : vector<1x256xi1>, vector<1x256xf32>
    %c0_i32_58 = arith.constant 0 : i32
    %211 = arith.sitofp %c0_i32_58 : i32 to f32
    %212 = vector.broadcast %211 : f32 to vector<1x48xf32>
    %213 = tpu.concatenate %212, %210 in 1 : vector<1x48xf32>, vector<1x256xf32> -> vector<1x304xf32>
    %214 = vector.broadcast %211 : f32 to vector<1x48xf32>
    %215 = tpu.concatenate %213, %214 in 1 : vector<1x304xf32>, vector<1x48xf32> -> vector<1x352xf32>
    %216 = vector.extract_strided_slice %159 {offsets = [0, 6], sizes = [1, 256], strides = [1, 1]} : vector<1x262xf32> to vector<1x256xf32>
    %c13_i32_59 = arith.constant 13 : i32
    %217 = vector.broadcast %c13_i32_59 : i32 to vector<1x256xi32>
    %218 = arith.cmpi slt, %83, %217 : vector<1x256xi32>
    %cst_60 = arith.constant 0.000000e+00 : f32
    %219 = vector.broadcast %cst_60 : f32 to vector<1x256xf32>
    %220 = arith.select %218, %216, %219 : vector<1x256xi1>, vector<1x256xf32>
    %c0_i32_61 = arith.constant 0 : i32
    %221 = arith.sitofp %c0_i32_61 : i32 to f32
    %222 = vector.broadcast %221 : f32 to vector<1x48xf32>
    %223 = tpu.concatenate %222, %220 in 1 : vector<1x48xf32>, vector<1x256xf32> -> vector<1x304xf32>
    %224 = vector.broadcast %221 : f32 to vector<1x48xf32>
    %225 = tpu.concatenate %223, %224 in 1 : vector<1x304xf32>, vector<1x48xf32> -> vector<1x352xf32>
    %cst_62 = arith.constant 0.000000e+00 : f32
    %226 = vector.broadcast %cst_62 : f32 to vector<1x256xf32>
    %cst_63 = arith.constant 0.000000e+00 : f32
    %227 = vector.broadcast %cst_63 : f32 to vector<1x256xf32>
    %cst_64 = arith.constant 0.000000e+00 : f32
    %228 = vector.broadcast %cst_64 : f32 to vector<1x256xf32>
    %cst_65 = arith.constant 0.000000e+00 : f32
    %229 = vector.broadcast %cst_65 : f32 to vector<1x256xf32>
    %c0_66 = arith.constant 0 : index
    %230 = memref.load %arg4[%c0_66] : memref<98xf32, #tpu.memory_space<smem>>
    %c49 = arith.constant 49 : index
    %231 = memref.load %arg4[%c49] : memref<98xf32, #tpu.memory_space<smem>>
    %232 = vector.extract_strided_slice %98 {offsets = [0, 0], sizes = [1, 256], strides = [1, 1]} : vector<1x352xf32> to vector<1x256xf32>
    %233 = vector.broadcast %230 : f32 to vector<1x256xf32>
    %234 = arith.mulf %233, %232 : vector<1x256xf32>
    %235 = vector.extract_strided_slice %169 {offsets = [0, 0], sizes = [1, 256], strides = [1, 1]} : vector<1x352xf32> to vector<1x256xf32>
    %236 = vector.broadcast %231 : f32 to vector<1x256xf32>
    %237 = arith.mulf %236, %235 : vector<1x256xf32>
    %238 = arith.addf %234, %237 : vector<1x256xf32>
    %239 = arith.addf %226, %238 : vector<1x256xf32>
    %c1 = arith.constant 1 : index
    %240 = memref.load %arg4[%c1] : memref<98xf32, #tpu.memory_space<smem>>
    %c50 = arith.constant 50 : index
    %241 = memref.load %arg4[%c50] : memref<98xf32, #tpu.memory_space<smem>>
    %242 = vector.extract_strided_slice %108 {offsets = [0, 0], sizes = [1, 256], strides = [1, 1]} : vector<1x352xf32> to vector<1x256xf32>
    %243 = vector.broadcast %240 : f32 to vector<1x256xf32>
    %244 = arith.mulf %243, %242 : vector<1x256xf32>
    %245 = vector.extract_strided_slice %179 {offsets = [0, 0], sizes = [1, 256], strides = [1, 1]} : vector<1x352xf32> to vector<1x256xf32>
    %246 = vector.broadcast %241 : f32 to vector<1x256xf32>
    %247 = arith.mulf %246, %245 : vector<1x256xf32>
    %248 = arith.addf %244, %247 : vector<1x256xf32>
    %249 = arith.addf %227, %248 : vector<1x256xf32>
    %c2 = arith.constant 2 : index
    %250 = memref.load %arg4[%c2] : memref<98xf32, #tpu.memory_space<smem>>
    %c51 = arith.constant 51 : index
    %251 = memref.load %arg4[%c51] : memref<98xf32, #tpu.memory_space<smem>>
    %252 = vector.extract_strided_slice %118 {offsets = [0, 0], sizes = [1, 256], strides = [1, 1]} : vector<1x352xf32> to vector<1x256xf32>
    %253 = vector.broadcast %250 : f32 to vector<1x256xf32>
    %254 = arith.mulf %253, %252 : vector<1x256xf32>
    %255 = vector.extract_strided_slice %189 {offsets = [0, 0], sizes = [1, 256], strides = [1, 1]} : vector<1x352xf32> to vector<1x256xf32>
    %256 = vector.broadcast %251 : f32 to vector<1x256xf32>
    %257 = arith.mulf %256, %255 : vector<1x256xf32>
    %258 = arith.addf %254, %257 : vector<1x256xf32>
    %259 = arith.addf %228, %258 : vector<1x256xf32>
    %c3 = arith.constant 3 : index
    %260 = memref.load %arg4[%c3] : memref<98xf32, #tpu.memory_space<smem>>
    %c52 = arith.constant 52 : index
    %261 = memref.load %arg4[%c52] : memref<98xf32, #tpu.memory_space<smem>>
    %262 = vector.extract_strided_slice %124 {offsets = [0, 0], sizes = [1, 256], strides = [1, 1]} : vector<1x352xf32> to vector<1x256xf32>
    %263 = vector.broadcast %260 : f32 to vector<1x256xf32>
    %264 = arith.mulf %263, %262 : vector<1x256xf32>
    %265 = vector.extract_strided_slice %195 {offsets = [0, 0], sizes = [1, 256], strides = [1, 1]} : vector<1x352xf32> to vector<1x256xf32>
    %266 = vector.broadcast %261 : f32 to vector<1x256xf32>
    %267 = arith.mulf %266, %265 : vector<1x256xf32>
    %268 = arith.addf %264, %267 : vector<1x256xf32>
    %269 = arith.addf %229, %268 : vector<1x256xf32>
    %c4 = arith.constant 4 : index
    %270 = memref.load %arg4[%c4] : memref<98xf32, #tpu.memory_space<smem>>
    %c53 = arith.constant 53 : index
    %271 = memref.load %arg4[%c53] : memref<98xf32, #tpu.memory_space<smem>>
    %272 = vector.extract_strided_slice %134 {offsets = [0, 0], sizes = [1, 256], strides = [1, 1]} : vector<1x352xf32> to vector<1x256xf32>
    %273 = vector.broadcast %270 : f32 to vector<1x256xf32>
    %274 = arith.mulf %273, %272 : vector<1x256xf32>
    %275 = vector.extract_strided_slice %205 {offsets = [0, 0], sizes = [1, 256], strides = [1, 1]} : vector<1x352xf32> to vector<1x256xf32>
    %276 = vector.broadcast %271 : f32 to vector<1x256xf32>
    %277 = arith.mulf %276, %275 : vector<1x256xf32>
    %278 = arith.addf %274, %277 : vector<1x256xf32>
    %279 = arith.addf %239, %278 : vector<1x256xf32>
    %c5 = arith.constant 5 : index
    %280 = memref.load %arg4[%c5] : memref<98xf32, #tpu.memory_space<smem>>
    %c54 = arith.constant 54 : index
    %281 = memref.load %arg4[%c54] : memref<98xf32, #tpu.memory_space<smem>>
    %282 = vector.extract_strided_slice %144 {offsets = [0, 0], sizes = [1, 256], strides = [1, 1]} : vector<1x352xf32> to vector<1x256xf32>
    %283 = vector.broadcast %280 : f32 to vector<1x256xf32>
    %284 = arith.mulf %283, %282 : vector<1x256xf32>
    %285 = vector.extract_strided_slice %215 {offsets = [0, 0], sizes = [1, 256], strides = [1, 1]} : vector<1x352xf32> to vector<1x256xf32>
    %286 = vector.broadcast %281 : f32 to vector<1x256xf32>
    %287 = arith.mulf %286, %285 : vector<1x256xf32>
    %288 = arith.addf %284, %287 : vector<1x256xf32>
    %289 = arith.addf %249, %288 : vector<1x256xf32>
    %c6 = arith.constant 6 : index
    %290 = memref.load %arg4[%c6] : memref<98xf32, #tpu.memory_space<smem>>
    %c55 = arith.constant 55 : index
    %291 = memref.load %arg4[%c55] : memref<98xf32, #tpu.memory_space<smem>>
    %292 = vector.extract_strided_slice %154 {offsets = [0, 0], sizes = [1, 256], strides = [1, 1]} : vector<1x352xf32> to vector<1x256xf32>
    %293 = vector.broadcast %290 : f32 to vector<1x256xf32>
    %294 = arith.mulf %293, %292 : vector<1x256xf32>
    %295 = vector.extract_strided_slice %225 {offsets = [0, 0], sizes = [1, 256], strides = [1, 1]} : vector<1x352xf32> to vector<1x256xf32>
    %296 = vector.broadcast %291 : f32 to vector<1x256xf32>
    %297 = arith.mulf %296, %295 : vector<1x256xf32>
    %298 = arith.addf %294, %297 : vector<1x256xf32>
    %299 = arith.addf %259, %298 : vector<1x256xf32>
    %c7 = arith.constant 7 : index
    %300 = memref.load %arg4[%c7] : memref<98xf32, #tpu.memory_space<smem>>
    %c56 = arith.constant 56 : index
    %301 = memref.load %arg4[%c56] : memref<98xf32, #tpu.memory_space<smem>>
    %302 = vector.extract_strided_slice %98 {offsets = [0, 16], sizes = [1, 256], strides = [1, 1]} : vector<1x352xf32> to vector<1x256xf32>
    %303 = vector.broadcast %300 : f32 to vector<1x256xf32>
    %304 = arith.mulf %303, %302 : vector<1x256xf32>
    %305 = vector.extract_strided_slice %169 {offsets = [0, 16], sizes = [1, 256], strides = [1, 1]} : vector<1x352xf32> to vector<1x256xf32>
    %306 = vector.broadcast %301 : f32 to vector<1x256xf32>
    %307 = arith.mulf %306, %305 : vector<1x256xf32>
    %308 = arith.addf %304, %307 : vector<1x256xf32>
    %309 = arith.addf %269, %308 : vector<1x256xf32>
    %c8 = arith.constant 8 : index
    %310 = memref.load %arg4[%c8] : memref<98xf32, #tpu.memory_space<smem>>
    %c57 = arith.constant 57 : index
    %311 = memref.load %arg4[%c57] : memref<98xf32, #tpu.memory_space<smem>>
    %312 = vector.extract_strided_slice %108 {offsets = [0, 16], sizes = [1, 256], strides = [1, 1]} : vector<1x352xf32> to vector<1x256xf32>
    %313 = vector.broadcast %310 : f32 to vector<1x256xf32>
    %314 = arith.mulf %313, %312 : vector<1x256xf32>
    %315 = vector.extract_strided_slice %179 {offsets = [0, 16], sizes = [1, 256], strides = [1, 1]} : vector<1x352xf32> to vector<1x256xf32>
    %316 = vector.broadcast %311 : f32 to vector<1x256xf32>
    %317 = arith.mulf %316, %315 : vector<1x256xf32>
    %318 = arith.addf %314, %317 : vector<1x256xf32>
    %319 = arith.addf %279, %318 : vector<1x256xf32>
    %c9 = arith.constant 9 : index
    %320 = memref.load %arg4[%c9] : memref<98xf32, #tpu.memory_space<smem>>
    %c58 = arith.constant 58 : index
    %321 = memref.load %arg4[%c58] : memref<98xf32, #tpu.memory_space<smem>>
    %322 = vector.extract_strided_slice %118 {offsets = [0, 16], sizes = [1, 256], strides = [1, 1]} : vector<1x352xf32> to vector<1x256xf32>
    %323 = vector.broadcast %320 : f32 to vector<1x256xf32>
    %324 = arith.mulf %323, %322 : vector<1x256xf32>
    %325 = vector.extract_strided_slice %189 {offsets = [0, 16], sizes = [1, 256], strides = [1, 1]} : vector<1x352xf32> to vector<1x256xf32>
    %326 = vector.broadcast %321 : f32 to vector<1x256xf32>
    %327 = arith.mulf %326, %325 : vector<1x256xf32>
    %328 = arith.addf %324, %327 : vector<1x256xf32>
    %329 = arith.addf %289, %328 : vector<1x256xf32>
    %c10 = arith.constant 10 : index
    %330 = memref.load %arg4[%c10] : memref<98xf32, #tpu.memory_space<smem>>
    %c59 = arith.constant 59 : index
    %331 = memref.load %arg4[%c59] : memref<98xf32, #tpu.memory_space<smem>>
    %332 = vector.extract_strided_slice %124 {offsets = [0, 16], sizes = [1, 256], strides = [1, 1]} : vector<1x352xf32> to vector<1x256xf32>
    %333 = vector.broadcast %330 : f32 to vector<1x256xf32>
    %334 = arith.mulf %333, %332 : vector<1x256xf32>
    %335 = vector.extract_strided_slice %195 {offsets = [0, 16], sizes = [1, 256], strides = [1, 1]} : vector<1x352xf32> to vector<1x256xf32>
    %336 = vector.broadcast %331 : f32 to vector<1x256xf32>
    %337 = arith.mulf %336, %335 : vector<1x256xf32>
    %338 = arith.addf %334, %337 : vector<1x256xf32>
    %339 = arith.addf %299, %338 : vector<1x256xf32>
    %c11 = arith.constant 11 : index
    %340 = memref.load %arg4[%c11] : memref<98xf32, #tpu.memory_space<smem>>
    %c60 = arith.constant 60 : index
    %341 = memref.load %arg4[%c60] : memref<98xf32, #tpu.memory_space<smem>>
    %342 = vector.extract_strided_slice %134 {offsets = [0, 16], sizes = [1, 256], strides = [1, 1]} : vector<1x352xf32> to vector<1x256xf32>
    %343 = vector.broadcast %340 : f32 to vector<1x256xf32>
    %344 = arith.mulf %343, %342 : vector<1x256xf32>
    %345 = vector.extract_strided_slice %205 {offsets = [0, 16], sizes = [1, 256], strides = [1, 1]} : vector<1x352xf32> to vector<1x256xf32>
    %346 = vector.broadcast %341 : f32 to vector<1x256xf32>
    %347 = arith.mulf %346, %345 : vector<1x256xf32>
    %348 = arith.addf %344, %347 : vector<1x256xf32>
    %349 = arith.addf %309, %348 : vector<1x256xf32>
    %c12 = arith.constant 12 : index
    %350 = memref.load %arg4[%c12] : memref<98xf32, #tpu.memory_space<smem>>
    %c61 = arith.constant 61 : index
    %351 = memref.load %arg4[%c61] : memref<98xf32, #tpu.memory_space<smem>>
    %352 = vector.extract_strided_slice %144 {offsets = [0, 16], sizes = [1, 256], strides = [1, 1]} : vector<1x352xf32> to vector<1x256xf32>
    %353 = vector.broadcast %350 : f32 to vector<1x256xf32>
    %354 = arith.mulf %353, %352 : vector<1x256xf32>
    %355 = vector.extract_strided_slice %215 {offsets = [0, 16], sizes = [1, 256], strides = [1, 1]} : vector<1x352xf32> to vector<1x256xf32>
    %356 = vector.broadcast %351 : f32 to vector<1x256xf32>
    %357 = arith.mulf %356, %355 : vector<1x256xf32>
    %358 = arith.addf %354, %357 : vector<1x256xf32>
    %359 = arith.addf %319, %358 : vector<1x256xf32>
    %c13 = arith.constant 13 : index
    %360 = memref.load %arg4[%c13] : memref<98xf32, #tpu.memory_space<smem>>
    %c62 = arith.constant 62 : index
    %361 = memref.load %arg4[%c62] : memref<98xf32, #tpu.memory_space<smem>>
    %362 = vector.extract_strided_slice %154 {offsets = [0, 16], sizes = [1, 256], strides = [1, 1]} : vector<1x352xf32> to vector<1x256xf32>
    %363 = vector.broadcast %360 : f32 to vector<1x256xf32>
    %364 = arith.mulf %363, %362 : vector<1x256xf32>
    %365 = vector.extract_strided_slice %225 {offsets = [0, 16], sizes = [1, 256], strides = [1, 1]} : vector<1x352xf32> to vector<1x256xf32>
    %366 = vector.broadcast %361 : f32 to vector<1x256xf32>
    %367 = arith.mulf %366, %365 : vector<1x256xf32>
    %368 = arith.addf %364, %367 : vector<1x256xf32>
    %369 = arith.addf %329, %368 : vector<1x256xf32>
    %c14 = arith.constant 14 : index
    %370 = memref.load %arg4[%c14] : memref<98xf32, #tpu.memory_space<smem>>
    %c63 = arith.constant 63 : index
    %371 = memref.load %arg4[%c63] : memref<98xf32, #tpu.memory_space<smem>>
    %372 = vector.extract_strided_slice %98 {offsets = [0, 32], sizes = [1, 256], strides = [1, 1]} : vector<1x352xf32> to vector<1x256xf32>
    %373 = vector.broadcast %370 : f32 to vector<1x256xf32>
    %374 = arith.mulf %373, %372 : vector<1x256xf32>
    %375 = vector.extract_strided_slice %169 {offsets = [0, 32], sizes = [1, 256], strides = [1, 1]} : vector<1x352xf32> to vector<1x256xf32>
    %376 = vector.broadcast %371 : f32 to vector<1x256xf32>
    %377 = arith.mulf %376, %375 : vector<1x256xf32>
    %378 = arith.addf %374, %377 : vector<1x256xf32>
    %379 = arith.addf %339, %378 : vector<1x256xf32>
    %c15 = arith.constant 15 : index
    %380 = memref.load %arg4[%c15] : memref<98xf32, #tpu.memory_space<smem>>
    %c64 = arith.constant 64 : index
    %381 = memref.load %arg4[%c64] : memref<98xf32, #tpu.memory_space<smem>>
    %382 = vector.extract_strided_slice %108 {offsets = [0, 32], sizes = [1, 256], strides = [1, 1]} : vector<1x352xf32> to vector<1x256xf32>
    %383 = vector.broadcast %380 : f32 to vector<1x256xf32>
    %384 = arith.mulf %383, %382 : vector<1x256xf32>
    %385 = vector.extract_strided_slice %179 {offsets = [0, 32], sizes = [1, 256], strides = [1, 1]} : vector<1x352xf32> to vector<1x256xf32>
    %386 = vector.broadcast %381 : f32 to vector<1x256xf32>
    %387 = arith.mulf %386, %385 : vector<1x256xf32>
    %388 = arith.addf %384, %387 : vector<1x256xf32>
    %389 = arith.addf %349, %388 : vector<1x256xf32>
    %c16 = arith.constant 16 : index
    %390 = memref.load %arg4[%c16] : memref<98xf32, #tpu.memory_space<smem>>
    %c65 = arith.constant 65 : index
    %391 = memref.load %arg4[%c65] : memref<98xf32, #tpu.memory_space<smem>>
    %392 = vector.extract_strided_slice %118 {offsets = [0, 32], sizes = [1, 256], strides = [1, 1]} : vector<1x352xf32> to vector<1x256xf32>
    %393 = vector.broadcast %390 : f32 to vector<1x256xf32>
    %394 = arith.mulf %393, %392 : vector<1x256xf32>
    %395 = vector.extract_strided_slice %189 {offsets = [0, 32], sizes = [1, 256], strides = [1, 1]} : vector<1x352xf32> to vector<1x256xf32>
    %396 = vector.broadcast %391 : f32 to vector<1x256xf32>
    %397 = arith.mulf %396, %395 : vector<1x256xf32>
    %398 = arith.addf %394, %397 : vector<1x256xf32>
    %399 = arith.addf %359, %398 : vector<1x256xf32>
    %c17 = arith.constant 17 : index
    %400 = memref.load %arg4[%c17] : memref<98xf32, #tpu.memory_space<smem>>
    %c66 = arith.constant 66 : index
    %401 = memref.load %arg4[%c66] : memref<98xf32, #tpu.memory_space<smem>>
    %402 = vector.extract_strided_slice %124 {offsets = [0, 32], sizes = [1, 256], strides = [1, 1]} : vector<1x352xf32> to vector<1x256xf32>
    %403 = vector.broadcast %400 : f32 to vector<1x256xf32>
    %404 = arith.mulf %403, %402 : vector<1x256xf32>
    %405 = vector.extract_strided_slice %195 {offsets = [0, 32], sizes = [1, 256], strides = [1, 1]} : vector<1x352xf32> to vector<1x256xf32>
    %406 = vector.broadcast %401 : f32 to vector<1x256xf32>
    %407 = arith.mulf %406, %405 : vector<1x256xf32>
    %408 = arith.addf %404, %407 : vector<1x256xf32>
    %409 = arith.addf %369, %408 : vector<1x256xf32>
    %c18 = arith.constant 18 : index
    %410 = memref.load %arg4[%c18] : memref<98xf32, #tpu.memory_space<smem>>
    %c67 = arith.constant 67 : index
    %411 = memref.load %arg4[%c67] : memref<98xf32, #tpu.memory_space<smem>>
    %412 = vector.extract_strided_slice %134 {offsets = [0, 32], sizes = [1, 256], strides = [1, 1]} : vector<1x352xf32> to vector<1x256xf32>
    %413 = vector.broadcast %410 : f32 to vector<1x256xf32>
    %414 = arith.mulf %413, %412 : vector<1x256xf32>
    %415 = vector.extract_strided_slice %205 {offsets = [0, 32], sizes = [1, 256], strides = [1, 1]} : vector<1x352xf32> to vector<1x256xf32>
    %416 = vector.broadcast %411 : f32 to vector<1x256xf32>
    %417 = arith.mulf %416, %415 : vector<1x256xf32>
    %418 = arith.addf %414, %417 : vector<1x256xf32>
    %419 = arith.addf %379, %418 : vector<1x256xf32>
    %c19 = arith.constant 19 : index
    %420 = memref.load %arg4[%c19] : memref<98xf32, #tpu.memory_space<smem>>
    %c68 = arith.constant 68 : index
    %421 = memref.load %arg4[%c68] : memref<98xf32, #tpu.memory_space<smem>>
    %422 = vector.extract_strided_slice %144 {offsets = [0, 32], sizes = [1, 256], strides = [1, 1]} : vector<1x352xf32> to vector<1x256xf32>
    %423 = vector.broadcast %420 : f32 to vector<1x256xf32>
    %424 = arith.mulf %423, %422 : vector<1x256xf32>
    %425 = vector.extract_strided_slice %215 {offsets = [0, 32], sizes = [1, 256], strides = [1, 1]} : vector<1x352xf32> to vector<1x256xf32>
    %426 = vector.broadcast %421 : f32 to vector<1x256xf32>
    %427 = arith.mulf %426, %425 : vector<1x256xf32>
    %428 = arith.addf %424, %427 : vector<1x256xf32>
    %429 = arith.addf %389, %428 : vector<1x256xf32>
    %c20 = arith.constant 20 : index
    %430 = memref.load %arg4[%c20] : memref<98xf32, #tpu.memory_space<smem>>
    %c69 = arith.constant 69 : index
    %431 = memref.load %arg4[%c69] : memref<98xf32, #tpu.memory_space<smem>>
    %432 = vector.extract_strided_slice %154 {offsets = [0, 32], sizes = [1, 256], strides = [1, 1]} : vector<1x352xf32> to vector<1x256xf32>
    %433 = vector.broadcast %430 : f32 to vector<1x256xf32>
    %434 = arith.mulf %433, %432 : vector<1x256xf32>
    %435 = vector.extract_strided_slice %225 {offsets = [0, 32], sizes = [1, 256], strides = [1, 1]} : vector<1x352xf32> to vector<1x256xf32>
    %436 = vector.broadcast %431 : f32 to vector<1x256xf32>
    %437 = arith.mulf %436, %435 : vector<1x256xf32>
    %438 = arith.addf %434, %437 : vector<1x256xf32>
    %439 = arith.addf %399, %438 : vector<1x256xf32>
    %c21 = arith.constant 21 : index
    %440 = memref.load %arg4[%c21] : memref<98xf32, #tpu.memory_space<smem>>
    %c70 = arith.constant 70 : index
    %441 = memref.load %arg4[%c70] : memref<98xf32, #tpu.memory_space<smem>>
    %442 = vector.extract_strided_slice %98 {offsets = [0, 48], sizes = [1, 256], strides = [1, 1]} : vector<1x352xf32> to vector<1x256xf32>
    %443 = vector.broadcast %440 : f32 to vector<1x256xf32>
    %444 = arith.mulf %443, %442 : vector<1x256xf32>
    %445 = vector.extract_strided_slice %169 {offsets = [0, 48], sizes = [1, 256], strides = [1, 1]} : vector<1x352xf32> to vector<1x256xf32>
    %446 = vector.broadcast %441 : f32 to vector<1x256xf32>
    %447 = arith.mulf %446, %445 : vector<1x256xf32>
    %448 = arith.addf %444, %447 : vector<1x256xf32>
    %449 = arith.addf %409, %448 : vector<1x256xf32>
    %c22 = arith.constant 22 : index
    %450 = memref.load %arg4[%c22] : memref<98xf32, #tpu.memory_space<smem>>
    %c71 = arith.constant 71 : index
    %451 = memref.load %arg4[%c71] : memref<98xf32, #tpu.memory_space<smem>>
    %452 = vector.extract_strided_slice %108 {offsets = [0, 48], sizes = [1, 256], strides = [1, 1]} : vector<1x352xf32> to vector<1x256xf32>
    %453 = vector.broadcast %450 : f32 to vector<1x256xf32>
    %454 = arith.mulf %453, %452 : vector<1x256xf32>
    %455 = vector.extract_strided_slice %179 {offsets = [0, 48], sizes = [1, 256], strides = [1, 1]} : vector<1x352xf32> to vector<1x256xf32>
    %456 = vector.broadcast %451 : f32 to vector<1x256xf32>
    %457 = arith.mulf %456, %455 : vector<1x256xf32>
    %458 = arith.addf %454, %457 : vector<1x256xf32>
    %459 = arith.addf %419, %458 : vector<1x256xf32>
    %c23 = arith.constant 23 : index
    %460 = memref.load %arg4[%c23] : memref<98xf32, #tpu.memory_space<smem>>
    %c72 = arith.constant 72 : index
    %461 = memref.load %arg4[%c72] : memref<98xf32, #tpu.memory_space<smem>>
    %462 = vector.extract_strided_slice %118 {offsets = [0, 48], sizes = [1, 256], strides = [1, 1]} : vector<1x352xf32> to vector<1x256xf32>
    %463 = vector.broadcast %460 : f32 to vector<1x256xf32>
    %464 = arith.mulf %463, %462 : vector<1x256xf32>
    %465 = vector.extract_strided_slice %189 {offsets = [0, 48], sizes = [1, 256], strides = [1, 1]} : vector<1x352xf32> to vector<1x256xf32>
    %466 = vector.broadcast %461 : f32 to vector<1x256xf32>
    %467 = arith.mulf %466, %465 : vector<1x256xf32>
    %468 = arith.addf %464, %467 : vector<1x256xf32>
    %469 = arith.addf %429, %468 : vector<1x256xf32>
    %c24 = arith.constant 24 : index
    %470 = memref.load %arg4[%c24] : memref<98xf32, #tpu.memory_space<smem>>
    %c73 = arith.constant 73 : index
    %471 = memref.load %arg4[%c73] : memref<98xf32, #tpu.memory_space<smem>>
    %472 = vector.extract_strided_slice %124 {offsets = [0, 48], sizes = [1, 256], strides = [1, 1]} : vector<1x352xf32> to vector<1x256xf32>
    %473 = vector.broadcast %470 : f32 to vector<1x256xf32>
    %474 = arith.mulf %473, %472 : vector<1x256xf32>
    %475 = vector.extract_strided_slice %195 {offsets = [0, 48], sizes = [1, 256], strides = [1, 1]} : vector<1x352xf32> to vector<1x256xf32>
    %476 = vector.broadcast %471 : f32 to vector<1x256xf32>
    %477 = arith.mulf %476, %475 : vector<1x256xf32>
    %478 = arith.addf %474, %477 : vector<1x256xf32>
    %479 = arith.addf %439, %478 : vector<1x256xf32>
    %c25 = arith.constant 25 : index
    %480 = memref.load %arg4[%c25] : memref<98xf32, #tpu.memory_space<smem>>
    %c74 = arith.constant 74 : index
    %481 = memref.load %arg4[%c74] : memref<98xf32, #tpu.memory_space<smem>>
    %482 = vector.extract_strided_slice %134 {offsets = [0, 48], sizes = [1, 256], strides = [1, 1]} : vector<1x352xf32> to vector<1x256xf32>
    %483 = vector.broadcast %480 : f32 to vector<1x256xf32>
    %484 = arith.mulf %483, %482 : vector<1x256xf32>
    %485 = vector.extract_strided_slice %205 {offsets = [0, 48], sizes = [1, 256], strides = [1, 1]} : vector<1x352xf32> to vector<1x256xf32>
    %486 = vector.broadcast %481 : f32 to vector<1x256xf32>
    %487 = arith.mulf %486, %485 : vector<1x256xf32>
    %488 = arith.addf %484, %487 : vector<1x256xf32>
    %489 = arith.addf %449, %488 : vector<1x256xf32>
    %c26 = arith.constant 26 : index
    %490 = memref.load %arg4[%c26] : memref<98xf32, #tpu.memory_space<smem>>
    %c75 = arith.constant 75 : index
    %491 = memref.load %arg4[%c75] : memref<98xf32, #tpu.memory_space<smem>>
    %492 = vector.extract_strided_slice %144 {offsets = [0, 48], sizes = [1, 256], strides = [1, 1]} : vector<1x352xf32> to vector<1x256xf32>
    %493 = vector.broadcast %490 : f32 to vector<1x256xf32>
    %494 = arith.mulf %493, %492 : vector<1x256xf32>
    %495 = vector.extract_strided_slice %215 {offsets = [0, 48], sizes = [1, 256], strides = [1, 1]} : vector<1x352xf32> to vector<1x256xf32>
    %496 = vector.broadcast %491 : f32 to vector<1x256xf32>
    %497 = arith.mulf %496, %495 : vector<1x256xf32>
    %498 = arith.addf %494, %497 : vector<1x256xf32>
    %499 = arith.addf %459, %498 : vector<1x256xf32>
    %c27 = arith.constant 27 : index
    %500 = memref.load %arg4[%c27] : memref<98xf32, #tpu.memory_space<smem>>
    %c76 = arith.constant 76 : index
    %501 = memref.load %arg4[%c76] : memref<98xf32, #tpu.memory_space<smem>>
    %502 = vector.extract_strided_slice %154 {offsets = [0, 48], sizes = [1, 256], strides = [1, 1]} : vector<1x352xf32> to vector<1x256xf32>
    %503 = vector.broadcast %500 : f32 to vector<1x256xf32>
    %504 = arith.mulf %503, %502 : vector<1x256xf32>
    %505 = vector.extract_strided_slice %225 {offsets = [0, 48], sizes = [1, 256], strides = [1, 1]} : vector<1x352xf32> to vector<1x256xf32>
    %506 = vector.broadcast %501 : f32 to vector<1x256xf32>
    %507 = arith.mulf %506, %505 : vector<1x256xf32>
    %508 = arith.addf %504, %507 : vector<1x256xf32>
    %509 = arith.addf %469, %508 : vector<1x256xf32>
    %c28 = arith.constant 28 : index
    %510 = memref.load %arg4[%c28] : memref<98xf32, #tpu.memory_space<smem>>
    %c77 = arith.constant 77 : index
    %511 = memref.load %arg4[%c77] : memref<98xf32, #tpu.memory_space<smem>>
    %512 = vector.extract_strided_slice %98 {offsets = [0, 64], sizes = [1, 256], strides = [1, 1]} : vector<1x352xf32> to vector<1x256xf32>
    %513 = vector.broadcast %510 : f32 to vector<1x256xf32>
    %514 = arith.mulf %513, %512 : vector<1x256xf32>
    %515 = vector.extract_strided_slice %169 {offsets = [0, 64], sizes = [1, 256], strides = [1, 1]} : vector<1x352xf32> to vector<1x256xf32>
    %516 = vector.broadcast %511 : f32 to vector<1x256xf32>
    %517 = arith.mulf %516, %515 : vector<1x256xf32>
    %518 = arith.addf %514, %517 : vector<1x256xf32>
    %519 = arith.addf %479, %518 : vector<1x256xf32>
    %c29 = arith.constant 29 : index
    %520 = memref.load %arg4[%c29] : memref<98xf32, #tpu.memory_space<smem>>
    %c78 = arith.constant 78 : index
    %521 = memref.load %arg4[%c78] : memref<98xf32, #tpu.memory_space<smem>>
    %522 = vector.extract_strided_slice %108 {offsets = [0, 64], sizes = [1, 256], strides = [1, 1]} : vector<1x352xf32> to vector<1x256xf32>
    %523 = vector.broadcast %520 : f32 to vector<1x256xf32>
    %524 = arith.mulf %523, %522 : vector<1x256xf32>
    %525 = vector.extract_strided_slice %179 {offsets = [0, 64], sizes = [1, 256], strides = [1, 1]} : vector<1x352xf32> to vector<1x256xf32>
    %526 = vector.broadcast %521 : f32 to vector<1x256xf32>
    %527 = arith.mulf %526, %525 : vector<1x256xf32>
    %528 = arith.addf %524, %527 : vector<1x256xf32>
    %529 = arith.addf %489, %528 : vector<1x256xf32>
    %c30 = arith.constant 30 : index
    %530 = memref.load %arg4[%c30] : memref<98xf32, #tpu.memory_space<smem>>
    %c79 = arith.constant 79 : index
    %531 = memref.load %arg4[%c79] : memref<98xf32, #tpu.memory_space<smem>>
    %532 = vector.extract_strided_slice %118 {offsets = [0, 64], sizes = [1, 256], strides = [1, 1]} : vector<1x352xf32> to vector<1x256xf32>
    %533 = vector.broadcast %530 : f32 to vector<1x256xf32>
    %534 = arith.mulf %533, %532 : vector<1x256xf32>
    %535 = vector.extract_strided_slice %189 {offsets = [0, 64], sizes = [1, 256], strides = [1, 1]} : vector<1x352xf32> to vector<1x256xf32>
    %536 = vector.broadcast %531 : f32 to vector<1x256xf32>
    %537 = arith.mulf %536, %535 : vector<1x256xf32>
    %538 = arith.addf %534, %537 : vector<1x256xf32>
    %539 = arith.addf %499, %538 : vector<1x256xf32>
    %c31 = arith.constant 31 : index
    %540 = memref.load %arg4[%c31] : memref<98xf32, #tpu.memory_space<smem>>
    %c80 = arith.constant 80 : index
    %541 = memref.load %arg4[%c80] : memref<98xf32, #tpu.memory_space<smem>>
    %542 = vector.extract_strided_slice %124 {offsets = [0, 64], sizes = [1, 256], strides = [1, 1]} : vector<1x352xf32> to vector<1x256xf32>
    %543 = vector.broadcast %540 : f32 to vector<1x256xf32>
    %544 = arith.mulf %543, %542 : vector<1x256xf32>
    %545 = vector.extract_strided_slice %195 {offsets = [0, 64], sizes = [1, 256], strides = [1, 1]} : vector<1x352xf32> to vector<1x256xf32>
    %546 = vector.broadcast %541 : f32 to vector<1x256xf32>
    %547 = arith.mulf %546, %545 : vector<1x256xf32>
    %548 = arith.addf %544, %547 : vector<1x256xf32>
    %549 = arith.addf %509, %548 : vector<1x256xf32>
    %c32 = arith.constant 32 : index
    %550 = memref.load %arg4[%c32] : memref<98xf32, #tpu.memory_space<smem>>
    %c81 = arith.constant 81 : index
    %551 = memref.load %arg4[%c81] : memref<98xf32, #tpu.memory_space<smem>>
    %552 = vector.extract_strided_slice %134 {offsets = [0, 64], sizes = [1, 256], strides = [1, 1]} : vector<1x352xf32> to vector<1x256xf32>
    %553 = vector.broadcast %550 : f32 to vector<1x256xf32>
    %554 = arith.mulf %553, %552 : vector<1x256xf32>
    %555 = vector.extract_strided_slice %205 {offsets = [0, 64], sizes = [1, 256], strides = [1, 1]} : vector<1x352xf32> to vector<1x256xf32>
    %556 = vector.broadcast %551 : f32 to vector<1x256xf32>
    %557 = arith.mulf %556, %555 : vector<1x256xf32>
    %558 = arith.addf %554, %557 : vector<1x256xf32>
    %559 = arith.addf %519, %558 : vector<1x256xf32>
    %c33 = arith.constant 33 : index
    %560 = memref.load %arg4[%c33] : memref<98xf32, #tpu.memory_space<smem>>
    %c82 = arith.constant 82 : index
    %561 = memref.load %arg4[%c82] : memref<98xf32, #tpu.memory_space<smem>>
    %562 = vector.extract_strided_slice %144 {offsets = [0, 64], sizes = [1, 256], strides = [1, 1]} : vector<1x352xf32> to vector<1x256xf32>
    %563 = vector.broadcast %560 : f32 to vector<1x256xf32>
    %564 = arith.mulf %563, %562 : vector<1x256xf32>
    %565 = vector.extract_strided_slice %215 {offsets = [0, 64], sizes = [1, 256], strides = [1, 1]} : vector<1x352xf32> to vector<1x256xf32>
    %566 = vector.broadcast %561 : f32 to vector<1x256xf32>
    %567 = arith.mulf %566, %565 : vector<1x256xf32>
    %568 = arith.addf %564, %567 : vector<1x256xf32>
    %569 = arith.addf %529, %568 : vector<1x256xf32>
    %c34 = arith.constant 34 : index
    %570 = memref.load %arg4[%c34] : memref<98xf32, #tpu.memory_space<smem>>
    %c83 = arith.constant 83 : index
    %571 = memref.load %arg4[%c83] : memref<98xf32, #tpu.memory_space<smem>>
    %572 = vector.extract_strided_slice %154 {offsets = [0, 64], sizes = [1, 256], strides = [1, 1]} : vector<1x352xf32> to vector<1x256xf32>
    %573 = vector.broadcast %570 : f32 to vector<1x256xf32>
    %574 = arith.mulf %573, %572 : vector<1x256xf32>
    %575 = vector.extract_strided_slice %225 {offsets = [0, 64], sizes = [1, 256], strides = [1, 1]} : vector<1x352xf32> to vector<1x256xf32>
    %576 = vector.broadcast %571 : f32 to vector<1x256xf32>
    %577 = arith.mulf %576, %575 : vector<1x256xf32>
    %578 = arith.addf %574, %577 : vector<1x256xf32>
    %579 = arith.addf %539, %578 : vector<1x256xf32>
    %c35 = arith.constant 35 : index
    %580 = memref.load %arg4[%c35] : memref<98xf32, #tpu.memory_space<smem>>
    %c84 = arith.constant 84 : index
    %581 = memref.load %arg4[%c84] : memref<98xf32, #tpu.memory_space<smem>>
    %582 = vector.extract_strided_slice %98 {offsets = [0, 80], sizes = [1, 256], strides = [1, 1]} : vector<1x352xf32> to vector<1x256xf32>
    %583 = vector.broadcast %580 : f32 to vector<1x256xf32>
    %584 = arith.mulf %583, %582 : vector<1x256xf32>
    %585 = vector.extract_strided_slice %169 {offsets = [0, 80], sizes = [1, 256], strides = [1, 1]} : vector<1x352xf32> to vector<1x256xf32>
    %586 = vector.broadcast %581 : f32 to vector<1x256xf32>
    %587 = arith.mulf %586, %585 : vector<1x256xf32>
    %588 = arith.addf %584, %587 : vector<1x256xf32>
    %589 = arith.addf %549, %588 : vector<1x256xf32>
    %c36 = arith.constant 36 : index
    %590 = memref.load %arg4[%c36] : memref<98xf32, #tpu.memory_space<smem>>
    %c85 = arith.constant 85 : index
    %591 = memref.load %arg4[%c85] : memref<98xf32, #tpu.memory_space<smem>>
    %592 = vector.extract_strided_slice %108 {offsets = [0, 80], sizes = [1, 256], strides = [1, 1]} : vector<1x352xf32> to vector<1x256xf32>
    %593 = vector.broadcast %590 : f32 to vector<1x256xf32>
    %594 = arith.mulf %593, %592 : vector<1x256xf32>
    %595 = vector.extract_strided_slice %179 {offsets = [0, 80], sizes = [1, 256], strides = [1, 1]} : vector<1x352xf32> to vector<1x256xf32>
    %596 = vector.broadcast %591 : f32 to vector<1x256xf32>
    %597 = arith.mulf %596, %595 : vector<1x256xf32>
    %598 = arith.addf %594, %597 : vector<1x256xf32>
    %599 = arith.addf %559, %598 : vector<1x256xf32>
    %c37 = arith.constant 37 : index
    %600 = memref.load %arg4[%c37] : memref<98xf32, #tpu.memory_space<smem>>
    %c86 = arith.constant 86 : index
    %601 = memref.load %arg4[%c86] : memref<98xf32, #tpu.memory_space<smem>>
    %602 = vector.extract_strided_slice %118 {offsets = [0, 80], sizes = [1, 256], strides = [1, 1]} : vector<1x352xf32> to vector<1x256xf32>
    %603 = vector.broadcast %600 : f32 to vector<1x256xf32>
    %604 = arith.mulf %603, %602 : vector<1x256xf32>
    %605 = vector.extract_strided_slice %189 {offsets = [0, 80], sizes = [1, 256], strides = [1, 1]} : vector<1x352xf32> to vector<1x256xf32>
    %606 = vector.broadcast %601 : f32 to vector<1x256xf32>
    %607 = arith.mulf %606, %605 : vector<1x256xf32>
    %608 = arith.addf %604, %607 : vector<1x256xf32>
    %609 = arith.addf %569, %608 : vector<1x256xf32>
    %c38 = arith.constant 38 : index
    %610 = memref.load %arg4[%c38] : memref<98xf32, #tpu.memory_space<smem>>
    %c87 = arith.constant 87 : index
    %611 = memref.load %arg4[%c87] : memref<98xf32, #tpu.memory_space<smem>>
    %612 = vector.extract_strided_slice %124 {offsets = [0, 80], sizes = [1, 256], strides = [1, 1]} : vector<1x352xf32> to vector<1x256xf32>
    %613 = vector.broadcast %610 : f32 to vector<1x256xf32>
    %614 = arith.mulf %613, %612 : vector<1x256xf32>
    %615 = vector.extract_strided_slice %195 {offsets = [0, 80], sizes = [1, 256], strides = [1, 1]} : vector<1x352xf32> to vector<1x256xf32>
    %616 = vector.broadcast %611 : f32 to vector<1x256xf32>
    %617 = arith.mulf %616, %615 : vector<1x256xf32>
    %618 = arith.addf %614, %617 : vector<1x256xf32>
    %619 = arith.addf %579, %618 : vector<1x256xf32>
    %c39 = arith.constant 39 : index
    %620 = memref.load %arg4[%c39] : memref<98xf32, #tpu.memory_space<smem>>
    %c88 = arith.constant 88 : index
    %621 = memref.load %arg4[%c88] : memref<98xf32, #tpu.memory_space<smem>>
    %622 = vector.extract_strided_slice %134 {offsets = [0, 80], sizes = [1, 256], strides = [1, 1]} : vector<1x352xf32> to vector<1x256xf32>
    %623 = vector.broadcast %620 : f32 to vector<1x256xf32>
    %624 = arith.mulf %623, %622 : vector<1x256xf32>
    %625 = vector.extract_strided_slice %205 {offsets = [0, 80], sizes = [1, 256], strides = [1, 1]} : vector<1x352xf32> to vector<1x256xf32>
    %626 = vector.broadcast %621 : f32 to vector<1x256xf32>
    %627 = arith.mulf %626, %625 : vector<1x256xf32>
    %628 = arith.addf %624, %627 : vector<1x256xf32>
    %629 = arith.addf %589, %628 : vector<1x256xf32>
    %c40 = arith.constant 40 : index
    %630 = memref.load %arg4[%c40] : memref<98xf32, #tpu.memory_space<smem>>
    %c89 = arith.constant 89 : index
    %631 = memref.load %arg4[%c89] : memref<98xf32, #tpu.memory_space<smem>>
    %632 = vector.extract_strided_slice %144 {offsets = [0, 80], sizes = [1, 256], strides = [1, 1]} : vector<1x352xf32> to vector<1x256xf32>
    %633 = vector.broadcast %630 : f32 to vector<1x256xf32>
    %634 = arith.mulf %633, %632 : vector<1x256xf32>
    %635 = vector.extract_strided_slice %215 {offsets = [0, 80], sizes = [1, 256], strides = [1, 1]} : vector<1x352xf32> to vector<1x256xf32>
    %636 = vector.broadcast %631 : f32 to vector<1x256xf32>
    %637 = arith.mulf %636, %635 : vector<1x256xf32>
    %638 = arith.addf %634, %637 : vector<1x256xf32>
    %639 = arith.addf %599, %638 : vector<1x256xf32>
    %c41 = arith.constant 41 : index
    %640 = memref.load %arg4[%c41] : memref<98xf32, #tpu.memory_space<smem>>
    %c90 = arith.constant 90 : index
    %641 = memref.load %arg4[%c90] : memref<98xf32, #tpu.memory_space<smem>>
    %642 = vector.extract_strided_slice %154 {offsets = [0, 80], sizes = [1, 256], strides = [1, 1]} : vector<1x352xf32> to vector<1x256xf32>
    %643 = vector.broadcast %640 : f32 to vector<1x256xf32>
    %644 = arith.mulf %643, %642 : vector<1x256xf32>
    %645 = vector.extract_strided_slice %225 {offsets = [0, 80], sizes = [1, 256], strides = [1, 1]} : vector<1x352xf32> to vector<1x256xf32>
    %646 = vector.broadcast %641 : f32 to vector<1x256xf32>
    %647 = arith.mulf %646, %645 : vector<1x256xf32>
    %648 = arith.addf %644, %647 : vector<1x256xf32>
    %649 = arith.addf %609, %648 : vector<1x256xf32>
    %c42 = arith.constant 42 : index
    %650 = memref.load %arg4[%c42] : memref<98xf32, #tpu.memory_space<smem>>
    %c91 = arith.constant 91 : index
    %651 = memref.load %arg4[%c91] : memref<98xf32, #tpu.memory_space<smem>>
    %652 = vector.extract_strided_slice %98 {offsets = [0, 96], sizes = [1, 256], strides = [1, 1]} : vector<1x352xf32> to vector<1x256xf32>
    %653 = vector.broadcast %650 : f32 to vector<1x256xf32>
    %654 = arith.mulf %653, %652 : vector<1x256xf32>
    %655 = vector.extract_strided_slice %169 {offsets = [0, 96], sizes = [1, 256], strides = [1, 1]} : vector<1x352xf32> to vector<1x256xf32>
    %656 = vector.broadcast %651 : f32 to vector<1x256xf32>
    %657 = arith.mulf %656, %655 : vector<1x256xf32>
    %658 = arith.addf %654, %657 : vector<1x256xf32>
    %659 = arith.addf %619, %658 : vector<1x256xf32>
    %c43 = arith.constant 43 : index
    %660 = memref.load %arg4[%c43] : memref<98xf32, #tpu.memory_space<smem>>
    %c92 = arith.constant 92 : index
    %661 = memref.load %arg4[%c92] : memref<98xf32, #tpu.memory_space<smem>>
    %662 = vector.extract_strided_slice %108 {offsets = [0, 96], sizes = [1, 256], strides = [1, 1]} : vector<1x352xf32> to vector<1x256xf32>
    %663 = vector.broadcast %660 : f32 to vector<1x256xf32>
    %664 = arith.mulf %663, %662 : vector<1x256xf32>
    %665 = vector.extract_strided_slice %179 {offsets = [0, 96], sizes = [1, 256], strides = [1, 1]} : vector<1x352xf32> to vector<1x256xf32>
    %666 = vector.broadcast %661 : f32 to vector<1x256xf32>
    %667 = arith.mulf %666, %665 : vector<1x256xf32>
    %668 = arith.addf %664, %667 : vector<1x256xf32>
    %669 = arith.addf %629, %668 : vector<1x256xf32>
    %c44 = arith.constant 44 : index
    %670 = memref.load %arg4[%c44] : memref<98xf32, #tpu.memory_space<smem>>
    %c93 = arith.constant 93 : index
    %671 = memref.load %arg4[%c93] : memref<98xf32, #tpu.memory_space<smem>>
    %672 = vector.extract_strided_slice %118 {offsets = [0, 96], sizes = [1, 256], strides = [1, 1]} : vector<1x352xf32> to vector<1x256xf32>
    %673 = vector.broadcast %670 : f32 to vector<1x256xf32>
    %674 = arith.mulf %673, %672 : vector<1x256xf32>
    %675 = vector.extract_strided_slice %189 {offsets = [0, 96], sizes = [1, 256], strides = [1, 1]} : vector<1x352xf32> to vector<1x256xf32>
    %676 = vector.broadcast %671 : f32 to vector<1x256xf32>
    %677 = arith.mulf %676, %675 : vector<1x256xf32>
    %678 = arith.addf %674, %677 : vector<1x256xf32>
    %679 = arith.addf %639, %678 : vector<1x256xf32>
    %c45 = arith.constant 45 : index
    %680 = memref.load %arg4[%c45] : memref<98xf32, #tpu.memory_space<smem>>
    %c94 = arith.constant 94 : index
    %681 = memref.load %arg4[%c94] : memref<98xf32, #tpu.memory_space<smem>>
    %682 = vector.extract_strided_slice %124 {offsets = [0, 96], sizes = [1, 256], strides = [1, 1]} : vector<1x352xf32> to vector<1x256xf32>
    %683 = vector.broadcast %680 : f32 to vector<1x256xf32>
    %684 = arith.mulf %683, %682 : vector<1x256xf32>
    %685 = vector.extract_strided_slice %195 {offsets = [0, 96], sizes = [1, 256], strides = [1, 1]} : vector<1x352xf32> to vector<1x256xf32>
    %686 = vector.broadcast %681 : f32 to vector<1x256xf32>
    %687 = arith.mulf %686, %685 : vector<1x256xf32>
    %688 = arith.addf %684, %687 : vector<1x256xf32>
    %689 = arith.addf %649, %688 : vector<1x256xf32>
    %c46 = arith.constant 46 : index
    %690 = memref.load %arg4[%c46] : memref<98xf32, #tpu.memory_space<smem>>
    %c95 = arith.constant 95 : index
    %691 = memref.load %arg4[%c95] : memref<98xf32, #tpu.memory_space<smem>>
    %692 = vector.extract_strided_slice %134 {offsets = [0, 96], sizes = [1, 256], strides = [1, 1]} : vector<1x352xf32> to vector<1x256xf32>
    %693 = vector.broadcast %690 : f32 to vector<1x256xf32>
    %694 = arith.mulf %693, %692 : vector<1x256xf32>
    %695 = vector.extract_strided_slice %205 {offsets = [0, 96], sizes = [1, 256], strides = [1, 1]} : vector<1x352xf32> to vector<1x256xf32>
    %696 = vector.broadcast %691 : f32 to vector<1x256xf32>
    %697 = arith.mulf %696, %695 : vector<1x256xf32>
    %698 = arith.addf %694, %697 : vector<1x256xf32>
    %699 = arith.addf %659, %698 : vector<1x256xf32>
    %c47 = arith.constant 47 : index
    %700 = memref.load %arg4[%c47] : memref<98xf32, #tpu.memory_space<smem>>
    %c96 = arith.constant 96 : index
    %701 = memref.load %arg4[%c96] : memref<98xf32, #tpu.memory_space<smem>>
    %702 = vector.extract_strided_slice %144 {offsets = [0, 96], sizes = [1, 256], strides = [1, 1]} : vector<1x352xf32> to vector<1x256xf32>
    %703 = vector.broadcast %700 : f32 to vector<1x256xf32>
    %704 = arith.mulf %703, %702 : vector<1x256xf32>
    %705 = vector.extract_strided_slice %215 {offsets = [0, 96], sizes = [1, 256], strides = [1, 1]} : vector<1x352xf32> to vector<1x256xf32>
    %706 = vector.broadcast %701 : f32 to vector<1x256xf32>
    %707 = arith.mulf %706, %705 : vector<1x256xf32>
    %708 = arith.addf %704, %707 : vector<1x256xf32>
    %709 = arith.addf %669, %708 : vector<1x256xf32>
    %c48 = arith.constant 48 : index
    %710 = memref.load %arg4[%c48] : memref<98xf32, #tpu.memory_space<smem>>
    %c97 = arith.constant 97 : index
    %711 = memref.load %arg4[%c97] : memref<98xf32, #tpu.memory_space<smem>>
    %712 = vector.extract_strided_slice %154 {offsets = [0, 96], sizes = [1, 256], strides = [1, 1]} : vector<1x352xf32> to vector<1x256xf32>
    %713 = vector.broadcast %710 : f32 to vector<1x256xf32>
    %714 = arith.mulf %713, %712 : vector<1x256xf32>
    %715 = vector.extract_strided_slice %225 {offsets = [0, 96], sizes = [1, 256], strides = [1, 1]} : vector<1x352xf32> to vector<1x256xf32>
    %716 = vector.broadcast %711 : f32 to vector<1x256xf32>
    %717 = arith.mulf %716, %715 : vector<1x256xf32>
    %718 = arith.addf %714, %717 : vector<1x256xf32>
    %719 = arith.addf %679, %718 : vector<1x256xf32>
    %720 = arith.addf %719, %689 : vector<1x256xf32>
    %721 = arith.addf %699, %709 : vector<1x256xf32>
    %722 = arith.addf %720, %721 : vector<1x256xf32>
    %723 = arith.negf %722 : vector<1x256xf32>
    %724 = math.exp %723 : vector<1x256xf32>
    %cst_67 = arith.constant 1.000000e+00 : f32
    %725 = vector.broadcast %cst_67 : f32 to vector<1x256xf32>
    %726 = arith.addf %725, %724 : vector<1x256xf32>
    %727 = arith.divf %725, %726 : vector<1x256xf32>
    %728 = vector.shape_cast %727 : vector<1x256xf32> to vector<1x1x256xf32>
    %729 = vector.broadcast %728 : vector<1x1x256xf32> to vector<1x32x256xf32>
    %730 = arith.mulf %62, %729 : vector<1x32x256xf32>
    %c0_68 = arith.constant 0 : index
    %c0_69 = arith.constant 0 : index
    %c0_70 = arith.constant 0 : index
    %731 = vector.load %arg5[%c0_68, %c0_69, %c0_70] : memref<1x32x256xf32, #tpu.memory_space<vmem>>, vector<1x32x256xf32>
    tpu.vector_store %arg5[%c0_68, %c0_69, %c0_70], %730 {strides = array<i32>} : memref<1x32x256xf32, #tpu.memory_space<vmem>>, vector<1x32x256xf32>,
    return
  }
  func.func @transform_0(%arg0: i32) -> (i32, i32, i32) {
    %c0_i32 = arith.constant 0 : i32
    %c0_i32_0 = arith.constant 0 : i32
    %c0_i32_1 = arith.constant 0 : i32
    return %arg0, %c0_i32, %c0_i32_0 : i32, i32, i32
  }
  func.func @transform_1(%arg0: i32) -> (i32, i32, i32) {
    %c0_i32 = arith.constant 0 : i32
    %c0_i32_0 = arith.constant 0 : i32
    %c0_i32_1 = arith.constant 0 : i32
    %c0_i32_2 = arith.constant 0 : i32
    return %c0_i32, %c0_i32_0, %c0_i32_1 : i32, i32, i32
  }
  func.func @transform_2(%arg0: i32) -> (i32, i32, i32) {
    %c0_i32 = arith.constant 0 : i32
    %c0_i32_0 = arith.constant 0 : i32
    %c0_i32_1 = arith.constant 0 : i32
    %c0_i32_2 = arith.constant 0 : i32
    return %c0_i32, %c0_i32_0, %c0_i32_1 : i32, i32, i32
  }
  func.func @transform_3(%arg0: i32) -> i32 {
    %c0_i32 = arith.constant 0 : i32
    %c0_i32_0 = arith.constant 0 : i32
    return %c0_i32 : i32
  }
  func.func @transform_4(%arg0: i32) -> (i32, i32, i32) {
    %c0_i32 = arith.constant 0 : i32
    %c0_i32_0 = arith.constant 0 : i32
    %c0_i32_1 = arith.constant 0 : i32
    return %arg0, %c0_i32, %c0_i32_0 : i32, i32, i32
  }
}

</mosaic_0001>

<llo_original>
// kernel: tpu_custom_call.1
$region0: #{tpu_custom_call.1}
  #allocation0 [shape = 'u32[]', space=smem, size = 0x4, offset = 0x4, fixed_abs, tag = 'smem constant byte address 0x4 - core index']
  #allocation1 [shape = 'u32[144,128]{1,0:T(1,128)}', space=vmem, size = 0x12000, scoped, tag = 'internal scratch']
  %s0 = inlined_call_operand.vmem [shape: f32[2,32,256], index: 0, kind: input, shape index: {}]
  %s1 = inlined_call_operand.vmem [shape: f32[2,32,1], index: 1, kind: input, shape index: {}]
  %s2 = inlined_call_operand.vmem [shape: f32[2,32,1], index: 2, kind: input, shape index: {}]
  %s3 = inlined_call_operand.vmem [shape: f32[98], index: 3, kind: input, shape index: {}]
  %s4 = inlined_call_operand.hbm [shape: f32[2,32,256], index: 4, kind: output, shape index: {}]
  %s5 = sld [smem:[#allocation0]]
  $region53: #{tpu_custom_call.1} parent=0
    _
  %s7 = ssub.s32 1, %s5
  %s8 = scalar_select 0, %s7, %s5
  $region1: #{tpu_custom_call.1} parent=0
    #allocation2 [shape = 'u8[512]{0}', space=smem, size = 0x200, scoped, tag = 'input window, operand 3, single buffered']
    #allocation3 [shape = 's32[2]{0}', space=sflag, size = 0x8, scoped, tag = 'scoped memory for tpu_custom_call.1']
    #allocation4 [shape = 's32[2]{0}', space=sflag, size = 0x8, scoped, tag = 'scoped memory for tpu_custom_call.1']
    #allocation5 [shape = 'u8[65536]{0}', space=vmem, size = 0x10000, scoped, tag = 'output window, operand 0']
    %9 = vsyncpa [#allocation4], 0
    %10 = vsyncpa [#allocation3], 0
    %s11 = scalar_lea.sflag [#allocation3], 1
    %12 = vsyncpa %s11, 0
    loop: start=0, step=1, limit=4
    $region2: #{tpu_custom_call.1} parent=1 // loop_pre_header
      _
    $region3: #{tpu_custom_call.1} parent=1 // loop_header
      %s14 = sphi 0, %s18
      %p15 = scmp.ge.s32.totalorder %s14, 4
      %s24 = sphi 0, %s26
      %s27 = sphi 0, %s24
      %s28 = sphi 0, %s27
      %s44 = sphi 0, %s28
      %s48 = sphi 0, %s48
      %s50 = sphi 0, %s48
      %s51 = sphi 0, %s50
      %s65 = sphi 0, %s51
      %s69 = sphi 0, %s69
      %s71 = sphi 0, %s69
      %s72 = sphi 0, %s71
      %s86 = sphi 0, %s72
      %s90 = sphi 0, %s90
      %s92 = sphi 0, %s90
      %s93 = sphi 0, %s92
      %s107 = sphi 0, %s93
      %s113 = sphi 0, %s115
      %s116 = sphi 0, %s113
      %s117 = sphi 0, %s116
      %s133 = sphi 0, %s117
    $region4: #{tpu_custom_call.1} parent=1 // loop_header_branch
      %17 = sbr.rel (%p15) target = $region8
    $region5: #{tpu_custom_call.1} parent=1 // loop_body
      %s19 = ssub.s32 %s14, 1
      %s20 = ssub.s32 %s14, 2
      %s21 = sadd.s32 %s14, 1
      %s22 = ssub.s32 %s14, %s21
      %p23 = scmp.eq.s32.totalorder %s22, 0
      %s25 = sadd.s32 %s24, 1
      %s26 = scalar_select %p23, %s24, %s25
      %p29 = pneg %p23
      %p30 = scmp.eq.s32.totalorder %s14, 1
      %p31 = por %p29, %p30
      %p32 = scmp.ne.s32.totalorder %s24, %s27
      %p33 = scmp.eq.s32.totalorder %s14, 0
      %p34 = por %p32, %p33
      %p35 = scmp.ne.s32.totalorder %s24, %s27
      %p36 = scmp.eq.s32.totalorder %s19, 1
      %p37 = por %p35, %p36
      %p38 = scmp.ne.s32.totalorder %s27, %s28
      %p39 = scmp.eq.s32.totalorder %s19, 0
      %p40 = por %p38, %p39
      %p41 = scmp.ne.s32.totalorder %s27, %s28
      %p42 = scmp.eq.s32.totalorder %s20, 1
      %p43 = por %p41, %p42
      %p45 = scmp.ne.s32.totalorder %s28, %s44
      %p46 = scmp.eq.s32.totalorder %s20, 0
      %p47 = por %p45, %p46
      %s49 = sadd.s32 %s48, 1
      %p52 = scmp.eq.s32.totalorder %s14, 1
      %p53 = scmp.ne.s32.totalorder %s48, %s50
      %p54 = scmp.eq.s32.totalorder %s14, 0
      %p55 = por %p53, %p54
      %p56 = scmp.ne.s32.totalorder %s48, %s50
      %p57 = scmp.eq.s32.totalorder %s19, 1
      %p58 = por %p56, %p57
      %p59 = scmp.ne.s32.totalorder %s50, %s51
      %p60 = scmp.eq.s32.totalorder %s19, 0
      %p61 = por %p59, %p60
      %p62 = scmp.ne.s32.totalorder %s50, %s51
      %p63 = scmp.eq.s32.totalorder %s20, 1
      %p64 = por %p62, %p63
      %p66 = scmp.ne.s32.totalorder %s51, %s65
      %p67 = scmp.eq.s32.totalorder %s20, 0
      %p68 = por %p66, %p67
      %s70 = sadd.s32 %s69, 1
      %p73 = scmp.eq.s32.totalorder %s14, 1
      %p74 = scmp.ne.s32.totalorder %s69, %s71
      %p75 = scmp.eq.s32.totalorder %s14, 0
      %p76 = por %p74, %p75
      %p77 = scmp.ne.s32.totalorder %s69, %s71
      %p78 = scmp.eq.s32.totalorder %s19, 1
      %p79 = por %p77, %p78
      %p80 = scmp.ne.s32.totalorder %s71, %s72
      %p81 = scmp.eq.s32.totalorder %s19, 0
      %p82 = por %p80, %p81
      %p83 = scmp.ne.s32.totalorder %s71, %s72
      %p84 = scmp.eq.s32.totalorder %s20, 1
      %p85 = por %p83, %p84
      %p87 = scmp.ne.s32.totalorder %s72, %s86
      %p88 = scmp.eq.s32.totalorder %s20, 0
      %p89 = por %p87, %p88
      %s91 = sadd.s32 %s90, 1
      %p94 = scmp.eq.s32.totalorder %s14, 1
      %p95 = scmp.ne.s32.totalorder %s90, %s92
      %p96 = scmp.eq.s32.totalorder %s14, 0
      %p97 = por %p95, %p96
      %p98 = scmp.ne.s32.totalorder %s90, %s92
      %p99 = scmp.eq.s32.totalorder %s19, 1
      %p100 = por %p98, %p99
      %p101 = scmp.ne.s32.totalorder %s92, %s93
      %p102 = scmp.eq.s32.totalorder %s19, 0
      %p103 = por %p101, %p102
      %p104 = scmp.ne.s32.totalorder %s92, %s93
      %p105 = scmp.eq.s32.totalorder %s20, 1
      %p106 = por %p104, %p105
      %p108 = scmp.ne.s32.totalorder %s93, %s107
      %p109 = scmp.eq.s32.totalorder %s20, 0
      %p110 = por %p108, %p109
      %s111 = ssub.s32 %s14, %s21
      %p112 = scmp.eq.s32.totalorder %s111, 0
      %s114 = sadd.s32 %s113, 1
      %s115 = scalar_select %p112, %s113, %s114
      %p118 = pneg %p112
      %p119 = scmp.eq.s32.totalorder %s14, 1
      %p120 = por %p118, %p119
      %p121 = scmp.ne.s32.totalorder %s113, %s116
      %p122 = scmp.eq.s32.totalorder %s14, 0
      %p123 = por %p121, %p122
      %p124 = scmp.ne.s32.totalorder %s113, %s116
      %p125 = scmp.eq.s32.totalorder %s19, 1
      %p126 = por %p124, %p125
      %p127 = scmp.ne.s32.totalorder %s116, %s117
      %p128 = scmp.eq.s32.totalorder %s19, 0
      %p129 = por %p127, %p128
      %p130 = scmp.ne.s32.totalorder %s116, %s117
      %p131 = scmp.eq.s32.totalorder %s20, 1
      %p132 = por %p130, %p131
      %p134 = scmp.ne.s32.totalorder %s117, %s133
      %p135 = scmp.eq.s32.totalorder %s20, 0
      %p136 = por %p134, %p135
      %p137 = scmp.le.s32.totalorder 1, %s14
      %p138 = scmp.lt.s32.totalorder %s14, 3
      %p139 = pnand %p137, %p138
      %p140 = pneg %p139
      // Predicated region
      $region9: #{tpu_custom_call.1} parent=5 // pred_check
        _
      $region10: #{tpu_custom_call.1} parent=5 // pred_check_branch
        %142 = sbr.rel (%p139) target = $region12
      $region11: #{tpu_custom_call.1} parent=5 // pred_region
        %s143 = ssub.s32 %s14, 1
        // Predicated region
        $region13: #{tpu_custom_call.1} parent=11 // pred_check
          %p144 = pneg %p61
        $region14: #{tpu_custom_call.1} parent=11 // pred_check_branch
          %146 = sbr.rel (%p144) target = $region16
        $region15: #{tpu_custom_call.1} parent=11 // pred_region
          _
        $region16: #{tpu_custom_call.1} parent=11 // pred_fallthru
          _
        // Predicated region
        $region17: #{tpu_custom_call.1} parent=11 // pred_check
          %p147 = pneg %p82
        $region18: #{tpu_custom_call.1} parent=11 // pred_check_branch
          %149 = sbr.rel (%p147) target = $region20
        $region19: #{tpu_custom_call.1} parent=11 // pred_region
          _
        $region20: #{tpu_custom_call.1} parent=11 // pred_fallthru
          _
        // Predicated region
        $region21: #{tpu_custom_call.1} parent=11 // pred_check
          %p150 = pneg %p103
        $region22: #{tpu_custom_call.1} parent=11 // pred_check_branch
          %152 = sbr.rel (%p150) target = $region24
        $region23: #{tpu_custom_call.1} parent=11 // pred_region
          %s154 = ssub.s32 16, 16
          %155 = vsyncadd [#allocation4], %s154
          %s157 = sshll.u32 %s3, 4
          %s158 = int_to_ptr.vmem [resolvable:$true] %s157
          %160 = dma.vmem_to_smem %s158, 16, [#allocation2], [#allocation4]
        $region24: #{tpu_custom_call.1} parent=11 // pred_fallthru
          _
      $region12: #{tpu_custom_call.1} parent=5 // pred_fallthru
        _
      %p161 = scmp.lt.s32.totalorder %s14, 2
      // Predicated region
      $region25: #{tpu_custom_call.1} parent=5 // pred_check
        %p162 = pneg %p161
      $region26: #{tpu_custom_call.1} parent=5 // pred_check_branch
        %164 = sbr.rel (%p162) target = $region28
      $region27: #{tpu_custom_call.1} parent=5 // pred_region
        // Predicated region
        $region29: #{tpu_custom_call.1} parent=27 // pred_check
          %p165 = pneg %p34
        $region30: #{tpu_custom_call.1} parent=27 // pred_check_branch
          %167 = sbr.rel (%p165) target = $region32
        $region31: #{tpu_custom_call.1} parent=27 // pred_region
          %p168 = scmp.lt.s32.totalorder %s14, 1
          %s169 = scalar_select %p168, %s14, 1
          %s170 = smul.addr %s169, 8
          %s171 = smul.addr %s170, 8
          %s172 = scalar_lea.vmem %s0, %s171
        $region32: #{tpu_custom_call.1} parent=27 // pred_fallthru
          _
      $region28: #{tpu_custom_call.1} parent=5 // pred_fallthru
        _
      %p173 = scmp.le.s32.totalorder 1, %s14
      %p174 = scmp.lt.s32.totalorder %s14, 3
      %p175 = pnand %p173, %p174
      %p176 = pneg %p175
      // Predicated region
      $region33: #{tpu_custom_call.1} parent=5 // pred_check
        _
      $region34: #{tpu_custom_call.1} parent=5 // pred_check_branch
        %178 = sbr.rel (%p175) target = $region36
      $region35: #{tpu_custom_call.1} parent=5 // pred_region
        %s179 = ssub.s32 %s14, 1
        // Predicated region
        $region37: #{tpu_custom_call.1} parent=35 // pred_check
          %p180 = pneg %p103
        $region38: #{tpu_custom_call.1} parent=35 // pred_check_branch
          %182 = sbr.rel (%p180) target = $region40
        $region39: #{tpu_custom_call.1} parent=35 // pred_region
          %183 = dma.done [#allocation4], 16
        $region40: #{tpu_custom_call.1} parent=35 // pred_fallthru
          _
        %184 = sfence
        %p185 = scmp.lt.s32.totalorder %s19, 1
        %s186 = scalar_select %p185, %s19, 1
        %s187 = smul.addr %s186, 8
        %s188 = smul.addr %s187, 8
        %s189 = scalar_lea.vmem %s0, %s188
        %p190 = pneg %p40
        %p191 = pneg %p37
        %p192 = pneg %p61
        %p193 = pneg %p58
        %p194 = pneg %p82
        %p195 = pneg %p79
        %p196 = pneg %p103
        %p197 = pneg %p100
        %p198 = pneg %p129
        %p199 = pneg %p126
        %s200 = sand.u32 %s116, 1
        %s201 = scalar_lea.sflag [#allocation3], %s200
        %s202 = sand.u32 %s116, 1
        %s203 = smul.addr %s202, 64
        %s204 = scalar_lea.vmem [#allocation5], %s203
        %p205 = scmp.lt.s32.totalorder %s19, 1
        %s206 = scalar_select %p205, %s19, 1
        %s207 = smul.addr %s206, 8
        %s208 = smul.addr %s207, 8
        %s209 = scalar_lea.vmem %s0, %s208
        %v210 = vld [vmem:[%s209] sm:$0xff]
        %v211 = vld [vmem:[%s209 + $0x8] sm:$0xff]
        %v212 = vld [vmem:[%s209 + $0x10] sm:$0xff]
        %v213 = vld [vmem:[%s209 + $0x18] sm:$0xff]
        %v214 = vld [vmem:[%s209 + $0x20] sm:$0xff]
        %v215 = vld [vmem:[%s209 + $0x28] sm:$0xff]
        %v216 = vld [vmem:[%s209 + $0x30] sm:$0xff]
        %v217 = vld [vmem:[%s209 + $0x38] sm:$0xff]
        %v218 = vadd.f32 %v210, %v211
        %219 = vadd.xlane.f32.xlu0 %v218
        %v220 = vpop.xlane.xlu0 %219
        %v221 = vadd.f32 %v212, %v213
        %222 = vadd.xlane.f32.xlu0 %v221
        %v223 = vpop.xlane.xlu0 %222
        %v224 = vadd.f32 %v214, %v215
        %225 = vadd.xlane.f32.xlu0 %v224
        %v226 = vpop.xlane.xlu0 %225
        %v227 = vadd.f32 %v216, %v217
        %228 = vadd.xlane.f32.xlu0 %v227
        %v229 = vpop.xlane.xlu0 %228
        %v230 = vmul.f32 %v220, 0.00390625
        %v231 = vmul.f32 %v223, 0.00390625
        %v232 = vmul.f32 %v226, 0.00390625
        %v233 = vmul.f32 %v229, 0.00390625
        %v234 = vmax.f32 %v210, %v211
        %235 = vmax.xlane.f32.xlu0 %v234
        %v236 = vpop.xlane.xlu0 %235
        %v237 = vmax.f32 %v212, %v213
        %238 = vmax.xlane.f32.xlu0 %v237
        %v239 = vpop.xlane.xlu0 %238
        %v240 = vmax.f32 %v214, %v215
        %241 = vmax.xlane.f32.xlu0 %v240
        %v242 = vpop.xlane.xlu0 %241
        %v243 = vmax.f32 %v216, %v217
        %244 = vmax.xlane.f32.xlu0 %v243
        %v245 = vpop.xlane.xlu0 %244
        %v246 = vld [vmem:[%s1] sm:$0xff]
        %v247 = vld [vmem:[%s1 + $0x8] sm:$0xff]
        %v248 = vld [vmem:[%s1 + $0x10] sm:$0xff]
        %v249 = vld [vmem:[%s1 + $0x18] sm:$0xff]
        %v250 = vld [vmem:[%s1 + $0x20] sm:$0xff]
        %v251 = vld [vmem:[%s1 + $0x28] sm:$0xff]
        %v252 = vld [vmem:[%s1 + $0x30] sm:$0xff]
        %v253 = vld [vmem:[%s1 + $0x38] sm:$0xff]
        %v254 = vld [vmem:[%s2] sm:$0xff]
        %v255 = vld [vmem:[%s2 + $0x8] sm:$0xff]
        %v256 = vld [vmem:[%s2 + $0x10] sm:$0xff]
        %v257 = vld [vmem:[%s2 + $0x18] sm:$0xff]
        %v258 = vld [vmem:[%s2 + $0x20] sm:$0xff]
        %v259 = vld [vmem:[%s2 + $0x28] sm:$0xff]
        %v260 = vld [vmem:[%s2 + $0x30] sm:$0xff]
        %v261 = vld [vmem:[%s2 + $0x38] sm:$0xff]
        %v262 = vmul.f32 %v230, %v246
        %v263 = vmul.f32 %v231, %v247
        %v264 = vmul.f32 %v232, %v248
        %v265 = vmul.f32 %v233, %v249
        %vm266 = vcmask 7168
        %v267 = vsel %vm266, %v262, 0.0
        %v268 = vsel %vm266, %v263, 0.0
        %v269 = vadd.f32 %v267, %v268
        %v270 = vsel %vm266, %v264, 0.0
        %v271 = vadd.f32 %v269, %v270
        %v272 = vsel %vm266, %v265, 0.0
        %v273 = vadd.f32 %v271, %v272
        %v274 = vrot.slane %v273, 4
        %v275 = vadd.f32 %v273, %v274
        %v276 = vrot.slane %v275, 2
        %v277 = vadd.f32 %v275, %v276
        %v278 = vrot.slane %v277, 1
        %v279 = vadd.f32 %v277, %v278
        %v280 = vmax.f32 %v279, 0.0
        %v281 = vmul.f32 %v236, %v246
        %v282 = vmul.f32 %v239, %v247
        %v283 = vmul.f32 %v242, %v248
        %v284 = vmul.f32 %v245, %v249
        %v285 = vsel %vm266, %v281, 0.0
        %v286 = vsel %vm266, %v282, 0.0
        %v287 = vadd.f32 %v285, %v286
        %v288 = vsel %vm266, %v283, 0.0
        %v289 = vadd.f32 %v287, %v288
        %v290 = vsel %vm266, %v284, 0.0
        %v291 = vadd.f32 %v289, %v290
        %v292 = vrot.slane %v291, 4
        %v293 = vadd.f32 %v291, %v292
        %v294 = vrot.slane %v293, 2
        %v295 = vadd.f32 %v293, %v294
        %v296 = vrot.slane %v295, 1
        %v297 = vadd.f32 %v295, %v296
        %v298 = vmax.f32 %v297, 0.0
        %v299 = vmul.f32 %v280, %v254
        %v300 = vmul.f32 %v280, %v255
        %v301 = vmul.f32 %v280, %v256
        %v302 = vmul.f32 %v280, %v257
        %v303 = vadd.f32 %v299, 0.0
        %v304 = vadd.f32 %v300, 0.0
        %v305 = vadd.f32 %v301, 0.0
        %v306 = vadd.f32 %v302, 0.0
        %v307 = vmul.f32 %v298, %v254
        %v308 = vmul.f32 %v298, %v255
        %v309 = vmul.f32 %v298, %v256
        %v310 = vmul.f32 %v298, %v257
        %v311 = vadd.f32 %v307, 0.0
        %v312 = vadd.f32 %v308, 0.0
        %v313 = vadd.f32 %v309, 0.0
        %v314 = vadd.f32 %v310, 0.0
        %v315 = vmul.f32 %v230, %v250
        %v316 = vmul.f32 %v231, %v251
        %v317 = vmul.f32 %v232, %v252
        %v318 = vmul.f32 %v233, %v253
        %v319 = vsel %vm266, %v315, 0.0
        %v320 = vsel %vm266, %v316, 0.0
        %v321 = vadd.f32 %v319, %v320
        %v322 = vsel %vm266, %v317, 0.0
        %v323 = vadd.f32 %v321, %v322
        %v324 = vsel %vm266, %v318, 0.0
        %v325 = vadd.f32 %v323, %v324
        %v326 = vrot.slane %v325, 4
        %v327 = vadd.f32 %v325, %v326
        %v328 = vrot.slane %v327, 2
        %v329 = vadd.f32 %v327, %v328
        %v330 = vrot.slane %v329, 1
        %v331 = vadd.f32 %v329, %v330
        %v332 = vmax.f32 %v331, 0.0
        %v333 = vmul.f32 %v236, %v250
        %v334 = vmul.f32 %v239, %v251
        %v335 = vmul.f32 %v242, %v252
        %v336 = vmul.f32 %v245, %v253
        %v337 = vsel %vm266, %v333, 0.0
        %v338 = vsel %vm266, %v334, 0.0
        %v339 = vadd.f32 %v337, %v338
        %v340 = vsel %vm266, %v335, 0.0
        %v341 = vadd.f32 %v339, %v340
        %v342 = vsel %vm266, %v336, 0.0
        %v343 = vadd.f32 %v341, %v342
        %v344 = vrot.slane %v343, 4
        %v345 = vadd.f32 %v343, %v344
        %v346 = vrot.slane %v345, 2
        %v347 = vadd.f32 %v345, %v346
        %v348 = vrot.slane %v347, 1
        %v349 = vadd.f32 %v347, %v348
        %v350 = vmax.f32 %v349, 0.0
        %v351 = vmul.f32 %v332, %v258
        %v352 = vmul.f32 %v332, %v259
        %v353 = vmul.f32 %v332, %v260
        %v354 = vmul.f32 %v332, %v261
        %v355 = vadd.f32 %v303, %v351
        %v356 = vadd.f32 %v304, %v352
        %v357 = vadd.f32 %v305, %v353
        %v358 = vadd.f32 %v306, %v354
        %v359 = vmul.f32 %v350, %v258
        %v360 = vmul.f32 %v350, %v259
        %v361 = vmul.f32 %v350, %v260
        %v362 = vmul.f32 %v350, %v261
        %v363 = vadd.f32 %v311, %v359
        %v364 = vadd.f32 %v312, %v360
        %v365 = vadd.f32 %v313, %v361
        %v366 = vadd.f32 %v314, %v362
        %v367 = vadd.f32 %v355, %v363
        %v368 = vadd.f32 %v356, %v364
        %v369 = vadd.f32 %v357, %v365
        %v370 = vadd.f32 %v358, %v366
        %v371 = vxor.u32 %v367, 2147483648
        %v372 = vxor.u32 %v368, 2147483648
        %v373 = vxor.u32 %v369, 2147483648
        %v374 = vxor.u32 %v370, 2147483648
        %v375 = vmul.f32 %v371, 1.442695
        %v376 = vpow.pop %v375
        %v377 = vmul.f32 %v372, 1.442695
        %v378 = vpow.pop %v377
        %v379 = vmul.f32 %v373, 1.442695
        %v380 = vpow.pop %v379
        %v381 = vmul.f32 %v374, 1.442695
        %v382 = vpow.pop %v381
        %v383 = vadd.f32 %v376, 1.0
        %v384 = vadd.f32 %v378, 1.0
        %v385 = vadd.f32 %v380, 1.0
        %v386 = vadd.f32 %v382, 1.0
        %v387 = vrcp.pop %v383
        %v388 = vmul.f32 1.0, %v387
        %v389 = vrcp.pop %v384
        %v390 = vmul.f32 1.0, %v389
        %v391 = vrcp.pop %v385
        %v392 = vmul.f32 1.0, %v391
        %v393 = vrcp.pop %v386
        %v394 = vmul.f32 1.0, %v393
        %396 = vset.pattern.permute.xlu0 0
        %397 = vperm.xlu0 %396, %v388
        %v398 = vpop.permute.xlu0 %397
        %401 = vset.pattern.permute.xlu0 0
        %402 = vperm.xlu0 %401, %v390
        %v403 = vpop.permute.xlu0 %402
        %406 = vset.pattern.permute.xlu0 0
        %407 = vperm.xlu0 %406, %v392
        %v408 = vpop.permute.xlu0 %407
        %411 = vset.pattern.permute.xlu0 0
        %412 = vperm.xlu0 %411, %v394
        %v413 = vpop.permute.xlu0 %412
        %v415 = vmul.f32 %v210, %v398
        %v416 = vmul.f32 %v211, %v398
        %v417 = vmul.f32 %v212, %v403
        %v418 = vmul.f32 %v213, %v403
        %v419 = vmul.f32 %v214, %v408
        %v420 = vmul.f32 %v215, %v408
        %v421 = vmul.f32 %v216, %v413
        %v422 = vmul.f32 %v217, %v413
        %v423 = vadd.f32 %v415, %v417
        %v424 = vadd.f32 %v423, %v419
        %v425 = vadd.f32 %v424, %v421
        %v426 = vrot.slane %v425, 4
        %v427 = vadd.f32 %v425, %v426
        %v428 = vrot.slane %v427, 2
        %v429 = vadd.f32 %v427, %v428
        %v430 = vrot.slane %v429, 1
        %v431 = vadd.f32 %v429, %v430
        %v432 = vadd.f32 %v416, %v418
        %v433 = vadd.f32 %v432, %v420
        %v434 = vadd.f32 %v433, %v422
        %v435 = vrot.slane %v434, 4
        %v436 = vadd.f32 %v434, %v435
        %v437 = vrot.slane %v436, 2
        %v438 = vadd.f32 %v436, %v437
        %v439 = vrot.slane %v438, 1
        %v440 = vadd.f32 %v438, %v439
        %v441 = vrcp.pop 32.0
        %v442 = vmul.f32 %v431, %v441
        %v443 = vmul.f32 %v440, %v441
        %v444 = vmax.f32 %v415, %v419
        %v445 = vmax.f32 %v417, %v421
        %v446 = vmax.f32 %v444, %v445
        %v447 = vrot.slane %v446, 4
        %v448 = vmax.f32 %v446, %v447
        %v449 = vrot.slane %v448, 2
        %v450 = vmax.f32 %v448, %v449
        %v451 = vrot.slane %v450, 1
        %v452 = vmax.f32 %v450, %v451
        %v453 = vmax.f32 %v416, %v420
        %v454 = vmax.f32 %v418, %v422
        %v455 = vmax.f32 %v453, %v454
        %v456 = vrot.slane %v455, 4
        %v457 = vmax.f32 %v455, %v456
        %v458 = vrot.slane %v457, 2
        %v459 = vmax.f32 %v457, %v458
        %v460 = vrot.slane %v459, 1
        %v461 = vmax.f32 %v459, %v460
        %v462 = vlaneseq
        %v463 = vand.u32 %v462, 127
        %v464 = vadd.s32 %v463, 128
        %vm465 = vcmp.lt.s32.totalorder %v463, 0
        %v466 = vsub.s32 0, %v463
        %v467 = vsel %vm465, %v466, %v463
        %v468 = vshrl.u32 %v467, 4
        %v469 = vand.u32 %v467, 15
        %v470 = vsub.s32 0, %v469
        %v471 = vsel %vm465, %v470, %v469
        %vm472 = vcmp.lt.s32.totalorder %v464, 0
        %v473 = vsub.s32 0, %v464
        %v474 = vsel %vm472, %v473, %v464
        %v475 = vshrl.u32 %v474, 4
        %v476 = vand.u32 %v474, 15
        %v477 = vsub.s32 0, %v476
        %v478 = vsel %vm472, %v477, %v476
        %vm479 = vcmp.ne.s32.totalorder %v471, 0
        %vm480 = vcmp.ne.s32.totalorder %v478, 0
        %vm481 = vcmp.lt.s32.totalorder %v471, 0
        %vm482 = vcmp.lt.s32.totalorder %v478, 0
        %vm483 = vmand %vm481, %vm479
        %vm484 = vmand %vm482, %vm480
        %v485 = vadd.s32 %v471, 16
        %v486 = vadd.s32 %v478, 16
        %v487 = vsel %vm483, %v485, %v471
        %v488 = vsel %vm484, %v486, %v478
        %491 = vrot.lane.b32.xlu0 %v442, 3
        %v492 = vpop.permute.xlu0 %491
        %493 = vrot.lane.b32.xlu0 %v443, 3
        %v494 = vpop.permute.xlu0 %493
        %vm495 = vcmask 23552
        %v496 = vsel %vm495, %v492, %v494
        %v500 = vsel %vm495, 0.0, %v492
        %v501 = vsel %vm495, %v494, 0.0
        %vm502 = vcmp.ge.s32.totalorder %v487, 3
        %vm503 = vcmp.ge.s32.totalorder %v488, 3
        %v504 = vsel %vm502, %v500, 0.0
        %v505 = vsel %vm503, %v496, 0.0
        %508 = vrot.lane.b32.xlu0 %v504, 48
        %v509 = vpop.permute.xlu0 %508
        %510 = vrot.lane.b32.xlu0 %v505, 48
        %v511 = vpop.permute.xlu0 %510
        %vm512 = vcmask 392192
        %v513 = vsel %vm512, %v509, %v511
        %v517 = vsel %vm512, 0.0, %v509
        %v518 = vsel %vm512, %v511, 0.0
        %vm519 = vcmp.ge.s32.totalorder %v487, 2
        %vm520 = vcmp.ge.s32.totalorder %v488, 2
        %523 = vrot.lane.b32.xlu0 %v500, 127
        %v524 = vpop.permute.xlu0 %523
        %525 = vrot.lane.b32.xlu0 %v496, 127
        %v526 = vpop.permute.xlu0 %525
        %527 = vrot.lane.b32.xlu0 %v501, 127
        %v528 = vpop.permute.xlu0 %527
        %vm529 = vcmask 1039360
        %v530 = vsel %vm529, %v524, %v526
        %v531 = vsel %vm529, %v526, %v528
        %v534 = vsel %vm519, %v530, 0.0
        %v535 = vsel %vm520, %v531, 0.0
        %538 = vrot.lane.b32.xlu0 %v534, 48
        %v539 = vpop.permute.xlu0 %538
        %540 = vrot.lane.b32.xlu0 %v535, 48
        %v541 = vpop.permute.xlu0 %540
        %v542 = vsel %vm512, %v539, %v541
        %v546 = vsel %vm512, 0.0, %v539
        %v547 = vsel %vm512, %v541, 0.0
        %vm548 = vcmp.ge.s32.totalorder %v487, 1
        %vm549 = vcmp.ge.s32.totalorder %v488, 1
        %550 = vrot.lane.b32.xlu0 %v500, 126
        %v551 = vpop.permute.xlu0 %550
        %552 = vrot.lane.b32.xlu0 %v496, 126
        %v553 = vpop.permute.xlu0 %552
        %554 = vrot.lane.b32.xlu0 %v501, 126
        %v555 = vpop.permute.xlu0 %554
        %vm556 = vcmask 1031168
        %v557 = vsel %vm556, %v551, %v553
        %v558 = vsel %vm556, %v553, %v555
        %v561 = vsel %vm548, %v557, 0.0
        %v562 = vsel %vm549, %v558, 0.0
        %565 = vrot.lane.b32.xlu0 %v561, 48
        %v566 = vpop.permute.xlu0 %565
        %567 = vrot.lane.b32.xlu0 %v562, 48
        %v568 = vpop.permute.xlu0 %567
        %v569 = vsel %vm512, %v566, %v568
        %v573 = vsel %vm512, 0.0, %v566
        %v574 = vsel %vm512, %v568, 0.0
        %575 = vrot.lane.b32.xlu0 %v500, 45
        %v576 = vpop.permute.xlu0 %575
        %577 = vrot.lane.b32.xlu0 %v496, 45
        %v578 = vpop.permute.xlu0 %577
        %579 = vrot.lane.b32.xlu0 %v501, 45
        %v580 = vpop.permute.xlu0 %579
        %vm581 = vcmask 367616
        %v582 = vsel %vm581, %v576, %v578
        %v583 = vsel %vm581, %v578, %v580
        %v587 = vsel %vm512, 0.0, %v576
        %v588 = vsel %vm512, %v583, 0.0
        %vm589 = vcmp.lt.s32.totalorder %v487, 15
        %vm590 = vcmp.lt.s32.totalorder %v488, 15
        %591 = vrot.lane.b32.xlu0 %v500, 124
        %v592 = vpop.permute.xlu0 %591
        %593 = vrot.lane.b32.xlu0 %v496, 124
        %v594 = vpop.permute.xlu0 %593
        %595 = vrot.lane.b32.xlu0 %v501, 124
        %v596 = vpop.permute.xlu0 %595
        %vm597 = vcmask 1014784
        %v598 = vsel %vm597, %v592, %v594
        %v599 = vsel %vm597, %v594, %v596
        %v602 = vsel %vm589, %v598, 0.0
        %v603 = vsel %vm590, %v599, 0.0
        %606 = vrot.lane.b32.xlu0 %v602, 48
        %v607 = vpop.permute.xlu0 %606
        %608 = vrot.lane.b32.xlu0 %v603, 48
        %v609 = vpop.permute.xlu0 %608
        %v610 = vsel %vm512, %v607, %v609
        %v614 = vsel %vm512, 0.0, %v607
        %v615 = vsel %vm512, %v609, 0.0
        %vm616 = vcmp.lt.s32.totalorder %v487, 14
        %vm617 = vcmp.lt.s32.totalorder %v488, 14
        %618 = vrot.lane.b32.xlu0 %v500, 123
        %v619 = vpop.permute.xlu0 %618
        %620 = vrot.lane.b32.xlu0 %v496, 123
        %v621 = vpop.permute.xlu0 %620
        %622 = vrot.lane.b32.xlu0 %v501, 123
        %v623 = vpop.permute.xlu0 %622
        %vm624 = vcmask 1006592
        %v625 = vsel %vm624, %v619, %v621
        %v626 = vsel %vm624, %v621, %v623
        %v629 = vsel %vm616, %v625, 0.0
        %v630 = vsel %vm617, %v626, 0.0
        %633 = vrot.lane.b32.xlu0 %v629, 48
        %v634 = vpop.permute.xlu0 %633
        %635 = vrot.lane.b32.xlu0 %v630, 48
        %v636 = vpop.permute.xlu0 %635
        %v637 = vsel %vm512, %v634, %v636
        %v641 = vsel %vm512, 0.0, %v634
        %v642 = vsel %vm512, %v636, 0.0
        %vm643 = vcmp.lt.s32.totalorder %v487, 13
        %vm644 = vcmp.lt.s32.totalorder %v488, 13
        %645 = vrot.lane.b32.xlu0 %v500, 122
        %v646 = vpop.permute.xlu0 %645
        %647 = vrot.lane.b32.xlu0 %v496, 122
        %v648 = vpop.permute.xlu0 %647
        %649 = vrot.lane.b32.xlu0 %v501, 122
        %v650 = vpop.permute.xlu0 %649
        %vm651 = vcmask 998400
        %v652 = vsel %vm651, %v646, %v648
        %v653 = vsel %vm651, %v648, %v650
        %v656 = vsel %vm643, %v652, 0.0
        %v657 = vsel %vm644, %v653, 0.0
        %660 = vrot.lane.b32.xlu0 %v656, 48
        %v661 = vpop.permute.xlu0 %660
        %662 = vrot.lane.b32.xlu0 %v657, 48
        %v663 = vpop.permute.xlu0 %662
        %v664 = vsel %vm512, %v661, %v663
        %v668 = vsel %vm512, 0.0, %v661
        %v669 = vsel %vm512, %v663, 0.0
        %672 = vrot.lane.b32.xlu0 %v452, 3
        %v673 = vpop.permute.xlu0 %672
        %674 = vrot.lane.b32.xlu0 %v461, 3
        %v675 = vpop.permute.xlu0 %674
        %v676 = vsel %vm495, %v673, %v675
        %v680 = vsel %vm495, 0.0, %v673
        %v681 = vsel %vm495, %v675, 0.0
        %v682 = vsel %vm502, %v680, 0.0
        %v683 = vsel %vm503, %v676, 0.0
        %686 = vrot.lane.b32.xlu0 %v682, 48
        %v687 = vpop.permute.xlu0 %686
        %688 = vrot.lane.b32.xlu0 %v683, 48
        %v689 = vpop.permute.xlu0 %688
        %v690 = vsel %vm512, %v687, %v689
        %v694 = vsel %vm512, 0.0, %v687
        %v695 = vsel %vm512, %v689, 0.0
        %698 = vrot.lane.b32.xlu0 %v680, 127
        %v699 = vpop.permute.xlu0 %698
        %700 = vrot.lane.b32.xlu0 %v676, 127
        %v701 = vpop.permute.xlu0 %700
        %702 = vrot.lane.b32.xlu0 %v681, 127
        %v703 = vpop.permute.xlu0 %702
        %v704 = vsel %vm529, %v699, %v701
        %v705 = vsel %vm529, %v701, %v703
        %v708 = vsel %vm519, %v704, 0.0
        %v709 = vsel %vm520, %v705, 0.0
        %712 = vrot.lane.b32.xlu0 %v708, 48
        %v713 = vpop.permute.xlu0 %712
        %714 = vrot.lane.b32.xlu0 %v709, 48
        %v715 = vpop.permute.xlu0 %714
        %v716 = vsel %vm512, %v713, %v715
        %v720 = vsel %vm512, 0.0, %v713
        %v721 = vsel %vm512, %v715, 0.0
        %722 = vrot.lane.b32.xlu0 %v680, 126
        %v723 = vpop.permute.xlu0 %722
        %724 = vrot.lane.b32.xlu0 %v676, 126
        %v725 = vpop.permute.xlu0 %724
        %726 = vrot.lane.b32.xlu0 %v681, 126
        %v727 = vpop.permute.xlu0 %726
        %v728 = vsel %vm556, %v723, %v725
        %v729 = vsel %vm556, %v725, %v727
        %v732 = vsel %vm548, %v728, 0.0
        %v733 = vsel %vm549, %v729, 0.0
        %736 = vrot.lane.b32.xlu0 %v732, 48
        %v737 = vpop.permute.xlu0 %736
        %738 = vrot.lane.b32.xlu0 %v733, 48
        %v739 = vpop.permute.xlu0 %738
        %v740 = vsel %vm512, %v737, %v739
        %v744 = vsel %vm512, 0.0, %v737
        %v745 = vsel %vm512, %v739, 0.0
        %746 = vrot.lane.b32.xlu0 %v680, 45
        %v747 = vpop.permute.xlu0 %746
        %748 = vrot.lane.b32.xlu0 %v676, 45
        %v749 = vpop.permute.xlu0 %748
        %750 = vrot.lane.b32.xlu0 %v681, 45
        %v751 = vpop.permute.xlu0 %750
        %v752 = vsel %vm581, %v747, %v749
        %v753 = vsel %vm581, %v749, %v751
        %v757 = vsel %vm512, 0.0, %v747
        %v758 = vsel %vm512, %v753, 0.0
        %759 = vrot.lane.b32.xlu0 %v680, 124
        %v760 = vpop.permute.xlu0 %759
        %761 = vrot.lane.b32.xlu0 %v676, 124
        %v762 = vpop.permute.xlu0 %761
        %763 = vrot.lane.b32.xlu0 %v681, 124
        %v764 = vpop.permute.xlu0 %763
        %v765 = vsel %vm597, %v760, %v762
        %v766 = vsel %vm597, %v762, %v764
        %v769 = vsel %vm589, %v765, 0.0
        %v770 = vsel %vm590, %v766, 0.0
        %773 = vrot.lane.b32.xlu0 %v769, 48
        %v774 = vpop.permute.xlu0 %773
        %775 = vrot.lane.b32.xlu0 %v770, 48
        %v776 = vpop.permute.xlu0 %775
        %v777 = vsel %vm512, %v774, %v776
        %v781 = vsel %vm512, 0.0, %v774
        %v782 = vsel %vm512, %v776, 0.0
        %783 = vrot.lane.b32.xlu0 %v680, 123
        %v784 = vpop.permute.xlu0 %783
        %785 = vrot.lane.b32.xlu0 %v676, 123
        %v786 = vpop.permute.xlu0 %785
        %787 = vrot.lane.b32.xlu0 %v681, 123
        %v788 = vpop.permute.xlu0 %787
        %v789 = vsel %vm624, %v784, %v786
        %v790 = vsel %vm624, %v786, %v788
        %v793 = vsel %vm616, %v789, 0.0
        %v794 = vsel %vm617, %v790, 0.0
        %797 = vrot.lane.b32.xlu0 %v793, 48
        %v798 = vpop.permute.xlu0 %797
        %799 = vrot.lane.b32.xlu0 %v794, 48
        %v800 = vpop.permute.xlu0 %799
        %v801 = vsel %vm512, %v798, %v800
        %v805 = vsel %vm512, 0.0, %v798
        %v806 = vsel %vm512, %v800, 0.0
        %807 = vrot.lane.b32.xlu0 %v680, 122
        %v808 = vpop.permute.xlu0 %807
        %809 = vrot.lane.b32.xlu0 %v676, 122
        %v810 = vpop.permute.xlu0 %809
        %811 = vrot.lane.b32.xlu0 %v681, 122
        %v812 = vpop.permute.xlu0 %811
        %v813 = vsel %vm651, %v808, %v810
        %v814 = vsel %vm651, %v810, %v812
        %v817 = vsel %vm643, %v813, 0.0
        %v818 = vsel %vm644, %v814, 0.0
        %821 = vrot.lane.b32.xlu0 %v817, 48
        %v822 = vpop.permute.xlu0 %821
        %823 = vrot.lane.b32.xlu0 %v818, 48
        %v824 = vpop.permute.xlu0 %823
        %v825 = vsel %vm512, %v822, %v824
        %v829 = vsel %vm512, 0.0, %v822
        %v830 = vsel %vm512, %v824, 0.0
        %s831 = sld [smem:[#allocation2]]
        %s832 = sld [smem:[#allocation2 + $0x31]]
        %v833 = vstv %s831
        %v834 = vmul.f32 %v833, %v517
        %v835 = vmul.f32 %v833, %v513
        %v836 = vstv %s832
        %v837 = vmul.f32 %v836, %v694
        %v838 = vmul.f32 %v836, %v690
        %v839 = vadd.f32 %v834, %v837
        %v840 = vadd.f32 %v835, %v838
        %v841 = vadd.f32 %v839, 0.0
        %v842 = vadd.f32 %v840, 0.0
        %s843 = sld [smem:[#allocation2 + $0x1]]
        %s844 = sld [smem:[#allocation2 + $0x32]]
        %v845 = vstv %s843
        %v846 = vmul.f32 %v845, %v546
        %v847 = vmul.f32 %v845, %v542
        %v848 = vstv %s844
        %v849 = vmul.f32 %v848, %v720
        %v850 = vmul.f32 %v848, %v716
        %v851 = vadd.f32 %v846, %v849
        %v852 = vadd.f32 %v847, %v850
        %v853 = vadd.f32 %v851, 0.0
        %v854 = vadd.f32 %v852, 0.0
        %s855 = sld [smem:[#allocation2 + $0x2]]
        %s856 = sld [smem:[#allocation2 + $0x33]]
        %v857 = vstv %s855
        %v858 = vmul.f32 %v857, %v573
        %v859 = vmul.f32 %v857, %v569
        %v860 = vstv %s856
        %v861 = vmul.f32 %v860, %v744
        %v862 = vmul.f32 %v860, %v740
        %v863 = vadd.f32 %v858, %v861
        %v864 = vadd.f32 %v859, %v862
        %v865 = vadd.f32 %v863, 0.0
        %v866 = vadd.f32 %v864, 0.0
        %s867 = sld [smem:[#allocation2 + $0x3]]
        %s868 = sld [smem:[#allocation2 + $0x34]]
        %v869 = vstv %s867
        %v870 = vmul.f32 %v869, %v587
        %v871 = vmul.f32 %v869, %v582
        %v872 = vstv %s868
        %v873 = vmul.f32 %v872, %v757
        %v874 = vmul.f32 %v872, %v752
        %v875 = vadd.f32 %v870, %v873
        %v876 = vadd.f32 %v871, %v874
        %v877 = vadd.f32 %v875, 0.0
        %v878 = vadd.f32 %v876, 0.0
        %s879 = sld [smem:[#allocation2 + $0x4]]
        %s880 = sld [smem:[#allocation2 + $0x35]]
        %v881 = vstv %s879
        %v882 = vmul.f32 %v881, %v614
        %v883 = vmul.f32 %v881, %v610
        %v884 = vstv %s880
        %v885 = vmul.f32 %v884, %v781
        %v886 = vmul.f32 %v884, %v777
        %v887 = vadd.f32 %v882, %v885
        %v888 = vadd.f32 %v883, %v886
        %v889 = vadd.f32 %v841, %v887
        %v890 = vadd.f32 %v842, %v888
        %s891 = sld [smem:[#allocation2 + $0x5]]
        %s892 = sld [smem:[#allocation2 + $0x36]]
        %v893 = vstv %s891
        %v894 = vmul.f32 %v893, %v641
        %v895 = vmul.f32 %v893, %v637
        %v896 = vstv %s892
        %v897 = vmul.f32 %v896, %v805
        %v898 = vmul.f32 %v896, %v801
        %v899 = vadd.f32 %v894, %v897
        %v900 = vadd.f32 %v895, %v898
        %v901 = vadd.f32 %v853, %v899
        %v902 = vadd.f32 %v854, %v900
        %s903 = sld [smem:[#allocation2 + $0x6]]
        %s904 = sld [smem:[#allocation2 + $0x37]]
        %v905 = vstv %s903
        %v906 = vmul.f32 %v905, %v668
        %v907 = vmul.f32 %v905, %v664
        %v908 = vstv %s904
        %v909 = vmul.f32 %v908, %v829
        %v910 = vmul.f32 %v908, %v825
        %v911 = vadd.f32 %v906, %v909
        %v912 = vadd.f32 %v907, %v910
        %v913 = vadd.f32 %v865, %v911
        %v914 = vadd.f32 %v866, %v912
        %s915 = sld [smem:[#allocation2 + $0x7]]
        %s916 = sld [smem:[#allocation2 + $0x38]]
        %v917 = vstv %s915
        %v918 = vmul.f32 %v917, %v517
        %v919 = vmul.f32 %v917, %v513
        %v920 = vmul.f32 %v917, %v518
        %v921 = vstv %s916
        %v922 = vmul.f32 %v921, %v694
        %v923 = vmul.f32 %v921, %v690
        %v924 = vmul.f32 %v921, %v695
        %v925 = vadd.f32 %v918, %v922
        %v926 = vadd.f32 %v919, %v923
        %v927 = vadd.f32 %v920, %v924
        %931 = vrot.lane.b32.xlu0 %v925, 112
        %v932 = vpop.permute.xlu0 %931
        %933 = vrot.lane.b32.xlu0 %v926, 112
        %v934 = vpop.permute.xlu0 %933
        %935 = vrot.lane.b32.xlu0 %v927, 112
        %v936 = vpop.permute.xlu0 %935
        %vm937 = vcmask 916480
        %v938 = vsel %vm937, %v932, %v934
        %v939 = vsel %vm937, %v934, %v936
        %v942 = vadd.f32 %v877, %v938
        %v943 = vadd.f32 %v878, %v939
        %s944 = sld [smem:[#allocation2 + $0x8]]
        %s945 = sld [smem:[#allocation2 + $0x39]]
        %v946 = vstv %s944
        %v947 = vmul.f32 %v946, %v546
        %v948 = vmul.f32 %v946, %v542
        %v949 = vmul.f32 %v946, %v547
        %v950 = vstv %s945
        %v951 = vmul.f32 %v950, %v720
        %v952 = vmul.f32 %v950, %v716
        %v953 = vmul.f32 %v950, %v721
        %v954 = vadd.f32 %v947, %v951
        %v955 = vadd.f32 %v948, %v952
        %v956 = vadd.f32 %v949, %v953
        %960 = vrot.lane.b32.xlu0 %v954, 112
        %v961 = vpop.permute.xlu0 %960
        %962 = vrot.lane.b32.xlu0 %v955, 112
        %v963 = vpop.permute.xlu0 %962
        %964 = vrot.lane.b32.xlu0 %v956, 112
        %v965 = vpop.permute.xlu0 %964
        %v966 = vsel %vm937, %v961, %v963
        %v967 = vsel %vm937, %v963, %v965
        %v970 = vadd.f32 %v889, %v966
        %v971 = vadd.f32 %v890, %v967
        %s972 = sld [smem:[#allocation2 + $0x9]]
        %s973 = sld [smem:[#allocation2 + $0x3a]]
        %v974 = vstv %s972
        %v975 = vmul.f32 %v974, %v573
        %v976 = vmul.f32 %v974, %v569
        %v977 = vmul.f32 %v974, %v574
        %v978 = vstv %s973
        %v979 = vmul.f32 %v978, %v744
        %v980 = vmul.f32 %v978, %v740
        %v981 = vmul.f32 %v978, %v745
        %v982 = vadd.f32 %v975, %v979
        %v983 = vadd.f32 %v976, %v980
        %v984 = vadd.f32 %v977, %v981
        %988 = vrot.lane.b32.xlu0 %v982, 112
        %v989 = vpop.permute.xlu0 %988
        %990 = vrot.lane.b32.xlu0 %v983, 112
        %v991 = vpop.permute.xlu0 %990
        %992 = vrot.lane.b32.xlu0 %v984, 112
        %v993 = vpop.permute.xlu0 %992
        %v994 = vsel %vm937, %v989, %v991
        %v995 = vsel %vm937, %v991, %v993
        %v998 = vadd.f32 %v901, %v994
        %v999 = vadd.f32 %v902, %v995
        %s1000 = sld [smem:[#allocation2 + $0xa]]
        %s1001 = sld [smem:[#allocation2 + $0x3b]]
        %v1002 = vstv %s1000
        %v1003 = vmul.f32 %v1002, %v587
        %v1004 = vmul.f32 %v1002, %v582
        %v1005 = vmul.f32 %v1002, %v588
        %v1006 = vstv %s1001
        %v1007 = vmul.f32 %v1006, %v757
        %v1008 = vmul.f32 %v1006, %v752
        %v1009 = vmul.f32 %v1006, %v758
        %v1010 = vadd.f32 %v1003, %v1007
        %v1011 = vadd.f32 %v1004, %v1008
        %v1012 = vadd.f32 %v1005, %v1009
        %1016 = vrot.lane.b32.xlu0 %v1010, 112
        %v1017 = vpop.permute.xlu0 %1016
        %1018 = vrot.lane.b32.xlu0 %v1011, 112
        %v1019 = vpop.permute.xlu0 %1018
        %1020 = vrot.lane.b32.xlu0 %v1012, 112
        %v1021 = vpop.permute.xlu0 %1020
        %v1022 = vsel %vm937, %v1017, %v1019
        %v1023 = vsel %vm937, %v1019, %v1021
        %v1026 = vadd.f32 %v913, %v1022
        %v1027 = vadd.f32 %v914, %v1023
        %s1028 = sld [smem:[#allocation2 + $0xb]]
        %s1029 = sld [smem:[#allocation2 + $0x3c]]
        %v1030 = vstv %s1028
        %v1031 = vmul.f32 %v1030, %v614
        %v1032 = vmul.f32 %v1030, %v610
        %v1033 = vmul.f32 %v1030, %v615
        %v1034 = vstv %s1029
        %v1035 = vmul.f32 %v1034, %v781
        %v1036 = vmul.f32 %v1034, %v777
        %v1037 = vmul.f32 %v1034, %v782
        %v1038 = vadd.f32 %v1031, %v1035
        %v1039 = vadd.f32 %v1032, %v1036
        %v1040 = vadd.f32 %v1033, %v1037
        %1044 = vrot.lane.b32.xlu0 %v1038, 112
        %v1045 = vpop.permute.xlu0 %1044
        %1046 = vrot.lane.b32.xlu0 %v1039, 112
        %v1047 = vpop.permute.xlu0 %1046
        %1048 = vrot.lane.b32.xlu0 %v1040, 112
        %v1049 = vpop.permute.xlu0 %1048
        %v1050 = vsel %vm937, %v1045, %v1047
        %v1051 = vsel %vm937, %v1047, %v1049
        %v1054 = vadd.f32 %v942, %v1050
        %v1055 = vadd.f32 %v943, %v1051
        %s1056 = sld [smem:[#allocation2 + $0xc]]
        %s1057 = sld [smem:[#allocation2 + $0x3d]]
        %v1058 = vstv %s1056
        %v1059 = vmul.f32 %v1058, %v641
        %v1060 = vmul.f32 %v1058, %v637
        %v1061 = vmul.f32 %v1058, %v642
        %v1062 = vstv %s1057
        %v1063 = vmul.f32 %v1062, %v805
        %v1064 = vmul.f32 %v1062, %v801
        %v1065 = vmul.f32 %v1062, %v806
        %v1066 = vadd.f32 %v1059, %v1063
        %v1067 = vadd.f32 %v1060, %v1064
        %v1068 = vadd.f32 %v1061, %v1065
        %1072 = vrot.lane.b32.xlu0 %v1066, 112
        %v1073 = vpop.permute.xlu0 %1072
        %1074 = vrot.lane.b32.xlu0 %v1067, 112
        %v1075 = vpop.permute.xlu0 %1074
        %1076 = vrot.lane.b32.xlu0 %v1068, 112
        %v1077 = vpop.permute.xlu0 %1076
        %v1078 = vsel %vm937, %v1073, %v1075
        %v1079 = vsel %vm937, %v1075, %v1077
        %v1082 = vadd.f32 %v970, %v1078
        %v1083 = vadd.f32 %v971, %v1079
        %s1084 = sld [smem:[#allocation2 + $0xd]]
        %s1085 = sld [smem:[#allocation2 + $0x3e]]
        %v1086 = vstv %s1084
        %v1087 = vmul.f32 %v1086, %v668
        %v1088 = vmul.f32 %v1086, %v664
        %v1089 = vmul.f32 %v1086, %v669
        %v1090 = vstv %s1085
        %v1091 = vmul.f32 %v1090, %v829
        %v1092 = vmul.f32 %v1090, %v825
        %v1093 = vmul.f32 %v1090, %v830
        %v1094 = vadd.f32 %v1087, %v1091
        %v1095 = vadd.f32 %v1088, %v1092
        %v1096 = vadd.f32 %v1089, %v1093
        %1100 = vrot.lane.b32.xlu0 %v1094, 112
        %v1101 = vpop.permute.xlu0 %1100
        %1102 = vrot.lane.b32.xlu0 %v1095, 112
        %v1103 = vpop.permute.xlu0 %1102
        %1104 = vrot.lane.b32.xlu0 %v1096, 112
        %v1105 = vpop.permute.xlu0 %1104
        %v1106 = vsel %vm937, %v1101, %v1103
        %v1107 = vsel %vm937, %v1103, %v1105
        %v1110 = vadd.f32 %v998, %v1106
        %v1111 = vadd.f32 %v999, %v1107
        %s1112 = sld [smem:[#allocation2 + $0xe]]
        %s1113 = sld [smem:[#allocation2 + $0x3f]]
        %v1114 = vstv %s1112
        %v1115 = vmul.f32 %v1114, %v517
        %v1116 = vmul.f32 %v1114, %v513
        %v1117 = vmul.f32 %v1114, %v518
        %v1118 = vstv %s1113
        %v1119 = vmul.f32 %v1118, %v694
        %v1120 = vmul.f32 %v1118, %v690
        %v1121 = vmul.f32 %v1118, %v695
        %v1122 = vadd.f32 %v1115, %v1119
        %v1123 = vadd.f32 %v1116, %v1120
        %v1124 = vadd.f32 %v1117, %v1121
        %1128 = vrot.lane.b32.xlu0 %v1122, 96
        %v1129 = vpop.permute.xlu0 %1128
        %1130 = vrot.lane.b32.xlu0 %v1123, 96
        %v1131 = vpop.permute.xlu0 %1130
        %1132 = vrot.lane.b32.xlu0 %v1124, 96
        %v1133 = vpop.permute.xlu0 %1132
        %vm1134 = vcmask 785408
        %v1135 = vsel %vm1134, %v1129, %v1131
        %v1136 = vsel %vm1134, %v1131, %v1133
        %v1139 = vadd.f32 %v1026, %v1135
        %v1140 = vadd.f32 %v1027, %v1136
        %s1141 = sld [smem:[#allocation2 + $0xf]]
        %s1142 = sld [smem:[#allocation2 + $0x40]]
        %v1143 = vstv %s1141
        %v1144 = vmul.f32 %v1143, %v546
        %v1145 = vmul.f32 %v1143, %v542
        %v1146 = vmul.f32 %v1143, %v547
        %v1147 = vstv %s1142
        %v1148 = vmul.f32 %v1147, %v720
        %v1149 = vmul.f32 %v1147, %v716
        %v1150 = vmul.f32 %v1147, %v721
        %v1151 = vadd.f32 %v1144, %v1148
        %v1152 = vadd.f32 %v1145, %v1149
        %v1153 = vadd.f32 %v1146, %v1150
        %1157 = vrot.lane.b32.xlu0 %v1151, 96
        %v1158 = vpop.permute.xlu0 %1157
        %1159 = vrot.lane.b32.xlu0 %v1152, 96
        %v1160 = vpop.permute.xlu0 %1159
        %1161 = vrot.lane.b32.xlu0 %v1153, 96
        %v1162 = vpop.permute.xlu0 %1161
        %v1163 = vsel %vm1134, %v1158, %v1160
        %v1164 = vsel %vm1134, %v1160, %v1162
        %v1167 = vadd.f32 %v1054, %v1163
        %v1168 = vadd.f32 %v1055, %v1164
        %s1169 = sld [smem:[#allocation2 + $0x10]]
        %s1170 = sld [smem:[#allocation2 + $0x41]]
        %v1171 = vstv %s1169
        %v1172 = vmul.f32 %v1171, %v573
        %v1173 = vmul.f32 %v1171, %v569
        %v1174 = vmul.f32 %v1171, %v574
        %v1175 = vstv %s1170
        %v1176 = vmul.f32 %v1175, %v744
        %v1177 = vmul.f32 %v1175, %v740
        %v1178 = vmul.f32 %v1175, %v745
        %v1179 = vadd.f32 %v1172, %v1176
        %v1180 = vadd.f32 %v1173, %v1177
        %v1181 = vadd.f32 %v1174, %v1178
        %1185 = vrot.lane.b32.xlu0 %v1179, 96
        %v1186 = vpop.permute.xlu0 %1185
        %1187 = vrot.lane.b32.xlu0 %v1180, 96
        %v1188 = vpop.permute.xlu0 %1187
        %1189 = vrot.lane.b32.xlu0 %v1181, 96
        %v1190 = vpop.permute.xlu0 %1189
        %v1191 = vsel %vm1134, %v1186, %v1188
        %v1192 = vsel %vm1134, %v1188, %v1190
        %v1195 = vadd.f32 %v1082, %v1191
        %v1196 = vadd.f32 %v1083, %v1192
        %s1197 = sld [smem:[#allocation2 + $0x11]]
        %s1198 = sld [smem:[#allocation2 + $0x42]]
        %v1199 = vstv %s1197
        %v1200 = vmul.f32 %v1199, %v587
        %v1201 = vmul.f32 %v1199, %v582
        %v1202 = vmul.f32 %v1199, %v588
        %v1203 = vstv %s1198
        %v1204 = vmul.f32 %v1203, %v757
        %v1205 = vmul.f32 %v1203, %v752
        %v1206 = vmul.f32 %v1203, %v758
        %v1207 = vadd.f32 %v1200, %v1204
        %v1208 = vadd.f32 %v1201, %v1205
        %v1209 = vadd.f32 %v1202, %v1206
        %1213 = vrot.lane.b32.xlu0 %v1207, 96
        %v1214 = vpop.permute.xlu0 %1213
        %1215 = vrot.lane.b32.xlu0 %v1208, 96
        %v1216 = vpop.permute.xlu0 %1215
        %1217 = vrot.lane.b32.xlu0 %v1209, 96
        %v1218 = vpop.permute.xlu0 %1217
        %v1219 = vsel %vm1134, %v1214, %v1216
        %v1220 = vsel %vm1134, %v1216, %v1218
        %v1223 = vadd.f32 %v1110, %v1219
        %v1224 = vadd.f32 %v1111, %v1220
        %s1225 = sld [smem:[#allocation2 + $0x12]]
        %s1226 = sld [smem:[#allocation2 + $0x43]]
        %v1227 = vstv %s1225
        %v1228 = vmul.f32 %v1227, %v614
        %v1229 = vmul.f32 %v1227, %v610
        %v1230 = vmul.f32 %v1227, %v615
        %v1231 = vstv %s1226
        %v1232 = vmul.f32 %v1231, %v781
        %v1233 = vmul.f32 %v1231, %v777
        %v1234 = vmul.f32 %v1231, %v782
        %v1235 = vadd.f32 %v1228, %v1232
        %v1236 = vadd.f32 %v1229, %v1233
        %v1237 = vadd.f32 %v1230, %v1234
        %1241 = vrot.lane.b32.xlu0 %v1235, 96
        %v1242 = vpop.permute.xlu0 %1241
        %1243 = vrot.lane.b32.xlu0 %v1236, 96
        %v1244 = vpop.permute.xlu0 %1243
        %1245 = vrot.lane.b32.xlu0 %v1237, 96
        %v1246 = vpop.permute.xlu0 %1245
        %v1247 = vsel %vm1134, %v1242, %v1244
        %v1248 = vsel %vm1134, %v1244, %v1246
        %v1251 = vadd.f32 %v1139, %v1247
        %v1252 = vadd.f32 %v1140, %v1248
        %s1253 = sld [smem:[#allocation2 + $0x13]]
        %s1254 = sld [smem:[#allocation2 + $0x44]]
        %v1255 = vstv %s1253
        %v1256 = vmul.f32 %v1255, %v641
        %v1257 = vmul.f32 %v1255, %v637
        %v1258 = vmul.f32 %v1255, %v642
        %v1259 = vstv %s1254
        %v1260 = vmul.f32 %v1259, %v805
        %v1261 = vmul.f32 %v1259, %v801
        %v1262 = vmul.f32 %v1259, %v806
        %v1263 = vadd.f32 %v1256, %v1260
        %v1264 = vadd.f32 %v1257, %v1261
        %v1265 = vadd.f32 %v1258, %v1262
        %1269 = vrot.lane.b32.xlu0 %v1263, 96
        %v1270 = vpop.permute.xlu0 %1269
        %1271 = vrot.lane.b32.xlu0 %v1264, 96
        %v1272 = vpop.permute.xlu0 %1271
        %1273 = vrot.lane.b32.xlu0 %v1265, 96
        %v1274 = vpop.permute.xlu0 %1273
        %v1275 = vsel %vm1134, %v1270, %v1272
        %v1276 = vsel %vm1134, %v1272, %v1274
        %v1279 = vadd.f32 %v1167, %v1275
        %v1280 = vadd.f32 %v1168, %v1276
        %s1281 = sld [smem:[#allocation2 + $0x14]]
        %s1282 = sld [smem:[#allocation2 + $0x45]]
        %v1283 = vstv %s1281
        %v1284 = vmul.f32 %v1283, %v668
        %v1285 = vmul.f32 %v1283, %v664
        %v1286 = vmul.f32 %v1283, %v669
        %v1287 = vstv %s1282
        %v1288 = vmul.f32 %v1287, %v829
        %v1289 = vmul.f32 %v1287, %v825
        %v1290 = vmul.f32 %v1287, %v830
        %v1291 = vadd.f32 %v1284, %v1288
        %v1292 = vadd.f32 %v1285, %v1289
        %v1293 = vadd.f32 %v1286, %v1290
        %1297 = vrot.lane.b32.xlu0 %v1291, 96
        %v1298 = vpop.permute.xlu0 %1297
        %1299 = vrot.lane.b32.xlu0 %v1292, 96
        %v1300 = vpop.permute.xlu0 %1299
        %1301 = vrot.lane.b32.xlu0 %v1293, 96
        %v1302 = vpop.permute.xlu0 %1301
        %v1303 = vsel %vm1134, %v1298, %v1300
        %v1304 = vsel %vm1134, %v1300, %v1302
        %v1307 = vadd.f32 %v1195, %v1303
        %v1308 = vadd.f32 %v1196, %v1304
        %s1309 = sld [smem:[#allocation2 + $0x15]]
        %s1310 = sld [smem:[#allocation2 + $0x46]]
        %v1311 = vstv %s1309
        %v1312 = vmul.f32 %v1311, %v517
        %v1313 = vmul.f32 %v1311, %v513
        %v1314 = vmul.f32 %v1311, %v518
        %v1315 = vstv %s1310
        %v1316 = vmul.f32 %v1315, %v694
        %v1317 = vmul.f32 %v1315, %v690
        %v1318 = vmul.f32 %v1315, %v695
        %v1319 = vadd.f32 %v1312, %v1316
        %v1320 = vadd.f32 %v1313, %v1317
        %v1321 = vadd.f32 %v1314, %v1318
        %1325 = vrot.lane.b32.xlu0 %v1319, 80
        %v1326 = vpop.permute.xlu0 %1325
        %1327 = vrot.lane.b32.xlu0 %v1320, 80
        %v1328 = vpop.permute.xlu0 %1327
        %1329 = vrot.lane.b32.xlu0 %v1321, 80
        %v1330 = vpop.permute.xlu0 %1329
        %vm1331 = vcmask 654336
        %v1332 = vsel %vm1331, %v1326, %v1328
        %v1333 = vsel %vm1331, %v1328, %v1330
        %v1336 = vadd.f32 %v1223, %v1332
        %v1337 = vadd.f32 %v1224, %v1333
        %s1338 = sld [smem:[#allocation2 + $0x16]]
        %s1339 = sld [smem:[#allocation2 + $0x47]]
        %v1340 = vstv %s1338
        %v1341 = vmul.f32 %v1340, %v546
        %v1342 = vmul.f32 %v1340, %v542
        %v1343 = vmul.f32 %v1340, %v547
        %v1344 = vstv %s1339
        %v1345 = vmul.f32 %v1344, %v720
        %v1346 = vmul.f32 %v1344, %v716
        %v1347 = vmul.f32 %v1344, %v721
        %v1348 = vadd.f32 %v1341, %v1345
        %v1349 = vadd.f32 %v1342, %v1346
        %v1350 = vadd.f32 %v1343, %v1347
        %1354 = vrot.lane.b32.xlu0 %v1348, 80
        %v1355 = vpop.permute.xlu0 %1354
        %1356 = vrot.lane.b32.xlu0 %v1349, 80
        %v1357 = vpop.permute.xlu0 %1356
        %1358 = vrot.lane.b32.xlu0 %v1350, 80
        %v1359 = vpop.permute.xlu0 %1358
        %v1360 = vsel %vm1331, %v1355, %v1357
        %v1361 = vsel %vm1331, %v1357, %v1359
        %v1364 = vadd.f32 %v1251, %v1360
        %v1365 = vadd.f32 %v1252, %v1361
        %s1366 = sld [smem:[#allocation2 + $0x17]]
        %s1367 = sld [smem:[#allocation2 + $0x48]]
        %v1368 = vstv %s1366
        %v1369 = vmul.f32 %v1368, %v573
        %v1370 = vmul.f32 %v1368, %v569
        %v1371 = vmul.f32 %v1368, %v574
        %v1372 = vstv %s1367
        %v1373 = vmul.f32 %v1372, %v744
        %v1374 = vmul.f32 %v1372, %v740
        %v1375 = vmul.f32 %v1372, %v745
        %v1376 = vadd.f32 %v1369, %v1373
        %v1377 = vadd.f32 %v1370, %v1374
        %v1378 = vadd.f32 %v1371, %v1375
        %1382 = vrot.lane.b32.xlu0 %v1376, 80
        %v1383 = vpop.permute.xlu0 %1382
        %1384 = vrot.lane.b32.xlu0 %v1377, 80
        %v1385 = vpop.permute.xlu0 %1384
        %1386 = vrot.lane.b32.xlu0 %v1378, 80
        %v1387 = vpop.permute.xlu0 %1386
        %v1388 = vsel %vm1331, %v1383, %v1385
        %v1389 = vsel %vm1331, %v1385, %v1387
        %v1392 = vadd.f32 %v1279, %v1388
        %v1393 = vadd.f32 %v1280, %v1389
        %s1394 = sld [smem:[#allocation2 + $0x18]]
        %s1395 = sld [smem:[#allocation2 + $0x49]]
        %v1396 = vstv %s1394
        %v1397 = vmul.f32 %v1396, %v587
        %v1398 = vmul.f32 %v1396, %v582
        %v1399 = vmul.f32 %v1396, %v588
        %v1400 = vstv %s1395
        %v1401 = vmul.f32 %v1400, %v757
        %v1402 = vmul.f32 %v1400, %v752
        %v1403 = vmul.f32 %v1400, %v758
        %v1404 = vadd.f32 %v1397, %v1401
        %v1405 = vadd.f32 %v1398, %v1402
        %v1406 = vadd.f32 %v1399, %v1403
        %1410 = vrot.lane.b32.xlu0 %v1404, 80
        %v1411 = vpop.permute.xlu0 %1410
        %1412 = vrot.lane.b32.xlu0 %v1405, 80
        %v1413 = vpop.permute.xlu0 %1412
        %1414 = vrot.lane.b32.xlu0 %v1406, 80
        %v1415 = vpop.permute.xlu0 %1414
        %v1416 = vsel %vm1331, %v1411, %v1413
        %v1417 = vsel %vm1331, %v1413, %v1415
        %v1420 = vadd.f32 %v1307, %v1416
        %v1421 = vadd.f32 %v1308, %v1417
        %s1422 = sld [smem:[#allocation2 + $0x19]]
        %s1423 = sld [smem:[#allocation2 + $0x4a]]
        %v1424 = vstv %s1422
        %v1425 = vmul.f32 %v1424, %v614
        %v1426 = vmul.f32 %v1424, %v610
        %v1427 = vmul.f32 %v1424, %v615
        %v1428 = vstv %s1423
        %v1429 = vmul.f32 %v1428, %v781
        %v1430 = vmul.f32 %v1428, %v777
        %v1431 = vmul.f32 %v1428, %v782
        %v1432 = vadd.f32 %v1425, %v1429
        %v1433 = vadd.f32 %v1426, %v1430
        %v1434 = vadd.f32 %v1427, %v1431
        %1438 = vrot.lane.b32.xlu0 %v1432, 80
        %v1439 = vpop.permute.xlu0 %1438
        %1440 = vrot.lane.b32.xlu0 %v1433, 80
        %v1441 = vpop.permute.xlu0 %1440
        %1442 = vrot.lane.b32.xlu0 %v1434, 80
        %v1443 = vpop.permute.xlu0 %1442
        %v1444 = vsel %vm1331, %v1439, %v1441
        %v1445 = vsel %vm1331, %v1441, %v1443
        %v1448 = vadd.f32 %v1336, %v1444
        %v1449 = vadd.f32 %v1337, %v1445
        %s1450 = sld [smem:[#allocation2 + $0x1a]]
        %s1451 = sld [smem:[#allocation2 + $0x4b]]
        %v1452 = vstv %s1450
        %v1453 = vmul.f32 %v1452, %v641
        %v1454 = vmul.f32 %v1452, %v637
        %v1455 = vmul.f32 %v1452, %v642
        %v1456 = vstv %s1451
        %v1457 = vmul.f32 %v1456, %v805
        %v1458 = vmul.f32 %v1456, %v801
        %v1459 = vmul.f32 %v1456, %v806
        %v1460 = vadd.f32 %v1453, %v1457
        %v1461 = vadd.f32 %v1454, %v1458
        %v1462 = vadd.f32 %v1455, %v1459
        %1466 = vrot.lane.b32.xlu0 %v1460, 80
        %v1467 = vpop.permute.xlu0 %1466
        %1468 = vrot.lane.b32.xlu0 %v1461, 80
        %v1469 = vpop.permute.xlu0 %1468
        %1470 = vrot.lane.b32.xlu0 %v1462, 80
        %v1471 = vpop.permute.xlu0 %1470
        %v1472 = vsel %vm1331, %v1467, %v1469
        %v1473 = vsel %vm1331, %v1469, %v1471
        %v1476 = vadd.f32 %v1364, %v1472
        %v1477 = vadd.f32 %v1365, %v1473
        %s1478 = sld [smem:[#allocation2 + $0x1b]]
        %s1479 = sld [smem:[#allocation2 + $0x4c]]
        %v1480 = vstv %s1478
        %v1481 = vmul.f32 %v1480, %v668
        %v1482 = vmul.f32 %v1480, %v664
        %v1483 = vmul.f32 %v1480, %v669
        %v1484 = vstv %s1479
        %v1485 = vmul.f32 %v1484, %v829
        %v1486 = vmul.f32 %v1484, %v825
        %v1487 = vmul.f32 %v1484, %v830
        %v1488 = vadd.f32 %v1481, %v1485
        %v1489 = vadd.f32 %v1482, %v1486
        %v1490 = vadd.f32 %v1483, %v1487
        %1494 = vrot.lane.b32.xlu0 %v1488, 80
        %v1495 = vpop.permute.xlu0 %1494
        %1496 = vrot.lane.b32.xlu0 %v1489, 80
        %v1497 = vpop.permute.xlu0 %1496
        %1498 = vrot.lane.b32.xlu0 %v1490, 80
        %v1499 = vpop.permute.xlu0 %1498
        %v1500 = vsel %vm1331, %v1495, %v1497
        %v1501 = vsel %vm1331, %v1497, %v1499
        %v1504 = vadd.f32 %v1392, %v1500
        %v1505 = vadd.f32 %v1393, %v1501
        %s1506 = sld [smem:[#allocation2 + $0x1c]]
        %s1507 = sld [smem:[#allocation2 + $0x4d]]
        %v1508 = vstv %s1506
        %v1509 = vmul.f32 %v1508, %v517
        %v1510 = vmul.f32 %v1508, %v513
        %v1511 = vmul.f32 %v1508, %v518
        %v1512 = vstv %s1507
        %v1513 = vmul.f32 %v1512, %v694
        %v1514 = vmul.f32 %v1512, %v690
        %v1515 = vmul.f32 %v1512, %v695
        %v1516 = vadd.f32 %v1509, %v1513
        %v1517 = vadd.f32 %v1510, %v1514
        %v1518 = vadd.f32 %v1511, %v1515
        %1522 = vrot.lane.b32.xlu0 %v1516, 64
        %v1523 = vpop.permute.xlu0 %1522
        %1524 = vrot.lane.b32.xlu0 %v1517, 64
        %v1525 = vpop.permute.xlu0 %1524
        %1526 = vrot.lane.b32.xlu0 %v1518, 64
        %v1527 = vpop.permute.xlu0 %1526
        %vm1528 = vcmask 523264
        %v1529 = vsel %vm1528, %v1523, %v1525
        %v1530 = vsel %vm1528, %v1525, %v1527
        %v1533 = vadd.f32 %v1420, %v1529
        %v1534 = vadd.f32 %v1421, %v1530
        %s1535 = sld [smem:[#allocation2 + $0x1d]]
        %s1536 = sld [smem:[#allocation2 + $0x4e]]
        %v1537 = vstv %s1535
        %v1538 = vmul.f32 %v1537, %v546
        %v1539 = vmul.f32 %v1537, %v542
        %v1540 = vmul.f32 %v1537, %v547
        %v1541 = vstv %s1536
        %v1542 = vmul.f32 %v1541, %v720
        %v1543 = vmul.f32 %v1541, %v716
        %v1544 = vmul.f32 %v1541, %v721
        %v1545 = vadd.f32 %v1538, %v1542
        %v1546 = vadd.f32 %v1539, %v1543
        %v1547 = vadd.f32 %v1540, %v1544
        %1551 = vrot.lane.b32.xlu0 %v1545, 64
        %v1552 = vpop.permute.xlu0 %1551
        %1553 = vrot.lane.b32.xlu0 %v1546, 64
        %v1554 = vpop.permute.xlu0 %1553
        %1555 = vrot.lane.b32.xlu0 %v1547, 64
        %v1556 = vpop.permute.xlu0 %1555
        %v1557 = vsel %vm1528, %v1552, %v1554
        %v1558 = vsel %vm1528, %v1554, %v1556
        %v1561 = vadd.f32 %v1448, %v1557
        %v1562 = vadd.f32 %v1449, %v1558
        %s1563 = sld [smem:[#allocation2 + $0x1e]]
        %s1564 = sld [smem:[#allocation2 + $0x4f]]
        %v1565 = vstv %s1563
        %v1566 = vmul.f32 %v1565, %v573
        %v1567 = vmul.f32 %v1565, %v569
        %v1568 = vmul.f32 %v1565, %v574
        %v1569 = vstv %s1564
        %v1570 = vmul.f32 %v1569, %v744
        %v1571 = vmul.f32 %v1569, %v740
        %v1572 = vmul.f32 %v1569, %v745
        %v1573 = vadd.f32 %v1566, %v1570
        %v1574 = vadd.f32 %v1567, %v1571
        %v1575 = vadd.f32 %v1568, %v1572
        %1579 = vrot.lane.b32.xlu0 %v1573, 64
        %v1580 = vpop.permute.xlu0 %1579
        %1581 = vrot.lane.b32.xlu0 %v1574, 64
        %v1582 = vpop.permute.xlu0 %1581
        %1583 = vrot.lane.b32.xlu0 %v1575, 64
        %v1584 = vpop.permute.xlu0 %1583
        %v1585 = vsel %vm1528, %v1580, %v1582
        %v1586 = vsel %vm1528, %v1582, %v1584
        %v1589 = vadd.f32 %v1476, %v1585
        %v1590 = vadd.f32 %v1477, %v1586
        %s1591 = sld [smem:[#allocation2 + $0x1f]]
        %s1592 = sld [smem:[#allocation2 + $0x50]]
        %v1593 = vstv %s1591
        %v1594 = vmul.f32 %v1593, %v587
        %v1595 = vmul.f32 %v1593, %v582
        %v1596 = vmul.f32 %v1593, %v588
        %v1597 = vstv %s1592
        %v1598 = vmul.f32 %v1597, %v757
        %v1599 = vmul.f32 %v1597, %v752
        %v1600 = vmul.f32 %v1597, %v758
        %v1601 = vadd.f32 %v1594, %v1598
        %v1602 = vadd.f32 %v1595, %v1599
        %v1603 = vadd.f32 %v1596, %v1600
        %1607 = vrot.lane.b32.xlu0 %v1601, 64
        %v1608 = vpop.permute.xlu0 %1607
        %1609 = vrot.lane.b32.xlu0 %v1602, 64
        %v1610 = vpop.permute.xlu0 %1609
        %1611 = vrot.lane.b32.xlu0 %v1603, 64
        %v1612 = vpop.permute.xlu0 %1611
        %v1613 = vsel %vm1528, %v1608, %v1610
        %v1614 = vsel %vm1528, %v1610, %v1612
        %v1617 = vadd.f32 %v1504, %v1613
        %v1618 = vadd.f32 %v1505, %v1614
        %s1619 = sld [smem:[#allocation2 + $0x20]]
        %s1620 = sld [smem:[#allocation2 + $0x51]]
        %v1621 = vstv %s1619
        %v1622 = vmul.f32 %v1621, %v614
        %v1623 = vmul.f32 %v1621, %v610
        %v1624 = vmul.f32 %v1621, %v615
        %v1625 = vstv %s1620
        %v1626 = vmul.f32 %v1625, %v781
        %v1627 = vmul.f32 %v1625, %v777
        %v1628 = vmul.f32 %v1625, %v782
        %v1629 = vadd.f32 %v1622, %v1626
        %v1630 = vadd.f32 %v1623, %v1627
        %v1631 = vadd.f32 %v1624, %v1628
        %1635 = vrot.lane.b32.xlu0 %v1629, 64
        %v1636 = vpop.permute.xlu0 %1635
        %1637 = vrot.lane.b32.xlu0 %v1630, 64
        %v1638 = vpop.permute.xlu0 %1637
        %1639 = vrot.lane.b32.xlu0 %v1631, 64
        %v1640 = vpop.permute.xlu0 %1639
        %v1641 = vsel %vm1528, %v1636, %v1638
        %v1642 = vsel %vm1528, %v1638, %v1640
        %v1645 = vadd.f32 %v1533, %v1641
        %v1646 = vadd.f32 %v1534, %v1642
        %s1647 = sld [smem:[#allocation2 + $0x21]]
        %s1648 = sld [smem:[#allocation2 + $0x52]]
        %v1649 = vstv %s1647
        %v1650 = vmul.f32 %v1649, %v641
        %v1651 = vmul.f32 %v1649, %v637
        %v1652 = vmul.f32 %v1649, %v642
        %v1653 = vstv %s1648
        %v1654 = vmul.f32 %v1653, %v805
        %v1655 = vmul.f32 %v1653, %v801
        %v1656 = vmul.f32 %v1653, %v806
        %v1657 = vadd.f32 %v1650, %v1654
        %v1658 = vadd.f32 %v1651, %v1655
        %v1659 = vadd.f32 %v1652, %v1656
        %1663 = vrot.lane.b32.xlu0 %v1657, 64
        %v1664 = vpop.permute.xlu0 %1663
        %1665 = vrot.lane.b32.xlu0 %v1658, 64
        %v1666 = vpop.permute.xlu0 %1665
        %1667 = vrot.lane.b32.xlu0 %v1659, 64
        %v1668 = vpop.permute.xlu0 %1667
        %v1669 = vsel %vm1528, %v1664, %v1666
        %v1670 = vsel %vm1528, %v1666, %v1668
        %v1673 = vadd.f32 %v1561, %v1669
        %v1674 = vadd.f32 %v1562, %v1670
        %s1675 = sld [smem:[#allocation2 + $0x22]]
        %s1676 = sld [smem:[#allocation2 + $0x53]]
        %v1677 = vstv %s1675
        %v1678 = vmul.f32 %v1677, %v668
        %v1679 = vmul.f32 %v1677, %v664
        %v1680 = vmul.f32 %v1677, %v669
        %v1681 = vstv %s1676
        %v1682 = vmul.f32 %v1681, %v829
        %v1683 = vmul.f32 %v1681, %v825
        %v1684 = vmul.f32 %v1681, %v830
        %v1685 = vadd.f32 %v1678, %v1682
        %v1686 = vadd.f32 %v1679, %v1683
        %v1687 = vadd.f32 %v1680, %v1684
        %1691 = vrot.lane.b32.xlu0 %v1685, 64
        %v1692 = vpop.permute.xlu0 %1691
        %1693 = vrot.lane.b32.xlu0 %v1686, 64
        %v1694 = vpop.permute.xlu0 %1693
        %1695 = vrot.lane.b32.xlu0 %v1687, 64
        %v1696 = vpop.permute.xlu0 %1695
        %v1697 = vsel %vm1528, %v1692, %v1694
        %v1698 = vsel %vm1528, %v1694, %v1696
        %v1701 = vadd.f32 %v1589, %v1697
        %v1702 = vadd.f32 %v1590, %v1698
        %s1703 = sld [smem:[#allocation2 + $0x23]]
        %s1704 = sld [smem:[#allocation2 + $0x54]]
        %v1705 = vstv %s1703
        %v1706 = vmul.f32 %v1705, %v517
        %v1707 = vmul.f32 %v1705, %v513
        %v1708 = vmul.f32 %v1705, %v518
        %v1709 = vstv %s1704
        %v1710 = vmul.f32 %v1709, %v694
        %v1711 = vmul.f32 %v1709, %v690
        %v1712 = vmul.f32 %v1709, %v695
        %v1713 = vadd.f32 %v1706, %v1710
        %v1714 = vadd.f32 %v1707, %v1711
        %v1715 = vadd.f32 %v1708, %v1712
        %1719 = vrot.lane.b32.xlu0 %v1713, 48
        %v1720 = vpop.permute.xlu0 %1719
        %1721 = vrot.lane.b32.xlu0 %v1714, 48
        %v1722 = vpop.permute.xlu0 %1721
        %1723 = vrot.lane.b32.xlu0 %v1715, 48
        %v1724 = vpop.permute.xlu0 %1723
        %v1725 = vsel %vm512, %v1720, %v1722
        %v1726 = vsel %vm512, %v1722, %v1724
        %v1729 = vadd.f32 %v1617, %v1725
        %v1730 = vadd.f32 %v1618, %v1726
        %s1731 = sld [smem:[#allocation2 + $0x24]]
        %s1732 = sld [smem:[#allocation2 + $0x55]]
        %v1733 = vstv %s1731
        %v1734 = vmul.f32 %v1733, %v546
        %v1735 = vmul.f32 %v1733, %v542
        %v1736 = vmul.f32 %v1733, %v547
        %v1737 = vstv %s1732
        %v1738 = vmul.f32 %v1737, %v720
        %v1739 = vmul.f32 %v1737, %v716
        %v1740 = vmul.f32 %v1737, %v721
        %v1741 = vadd.f32 %v1734, %v1738
        %v1742 = vadd.f32 %v1735, %v1739
        %v1743 = vadd.f32 %v1736, %v1740
        %1747 = vrot.lane.b32.xlu0 %v1741, 48
        %v1748 = vpop.permute.xlu0 %1747
        %1749 = vrot.lane.b32.xlu0 %v1742, 48
        %v1750 = vpop.permute.xlu0 %1749
        %1751 = vrot.lane.b32.xlu0 %v1743, 48
        %v1752 = vpop.permute.xlu0 %1751
        %v1753 = vsel %vm512, %v1748, %v1750
        %v1754 = vsel %vm512, %v1750, %v1752
        %v1757 = vadd.f32 %v1645, %v1753
        %v1758 = vadd.f32 %v1646, %v1754
        %s1759 = sld [smem:[#allocation2 + $0x25]]
        %s1760 = sld [smem:[#allocation2 + $0x56]]
        %v1761 = vstv %s1759
        %v1762 = vmul.f32 %v1761, %v573
        %v1763 = vmul.f32 %v1761, %v569
        %v1764 = vmul.f32 %v1761, %v574
        %v1765 = vstv %s1760
        %v1766 = vmul.f32 %v1765, %v744
        %v1767 = vmul.f32 %v1765, %v740
        %v1768 = vmul.f32 %v1765, %v745
        %v1769 = vadd.f32 %v1762, %v1766
        %v1770 = vadd.f32 %v1763, %v1767
        %v1771 = vadd.f32 %v1764, %v1768
        %1775 = vrot.lane.b32.xlu0 %v1769, 48
        %v1776 = vpop.permute.xlu0 %1775
        %1777 = vrot.lane.b32.xlu0 %v1770, 48
        %v1778 = vpop.permute.xlu0 %1777
        %1779 = vrot.lane.b32.xlu0 %v1771, 48
        %v1780 = vpop.permute.xlu0 %1779
        %v1781 = vsel %vm512, %v1776, %v1778
        %v1782 = vsel %vm512, %v1778, %v1780
        %v1785 = vadd.f32 %v1673, %v1781
        %v1786 = vadd.f32 %v1674, %v1782
        %s1787 = sld [smem:[#allocation2 + $0x26]]
        %s1788 = sld [smem:[#allocation2 + $0x57]]
        %v1789 = vstv %s1787
        %v1790 = vmul.f32 %v1789, %v587
        %v1791 = vmul.f32 %v1789, %v582
        %v1792 = vmul.f32 %v1789, %v588
        %v1793 = vstv %s1788
        %v1794 = vmul.f32 %v1793, %v757
        %v1795 = vmul.f32 %v1793, %v752
        %v1796 = vmul.f32 %v1793, %v758
        %v1797 = vadd.f32 %v1790, %v1794
        %v1798 = vadd.f32 %v1791, %v1795
        %v1799 = vadd.f32 %v1792, %v1796
        %1803 = vrot.lane.b32.xlu0 %v1797, 48
        %v1804 = vpop.permute.xlu0 %1803
        %1805 = vrot.lane.b32.xlu0 %v1798, 48
        %v1806 = vpop.permute.xlu0 %1805
        %1807 = vrot.lane.b32.xlu0 %v1799, 48
        %v1808 = vpop.permute.xlu0 %1807
        %v1809 = vsel %vm512, %v1804, %v1806
        %v1810 = vsel %vm512, %v1806, %v1808
        %v1813 = vadd.f32 %v1701, %v1809
        %v1814 = vadd.f32 %v1702, %v1810
        %s1815 = sld [smem:[#allocation2 + $0x27]]
        %s1816 = sld [smem:[#allocation2 + $0x58]]
        %v1817 = vstv %s1815
        %v1818 = vmul.f32 %v1817, %v614
        %v1819 = vmul.f32 %v1817, %v610
        %v1820 = vmul.f32 %v1817, %v615
        %v1821 = vstv %s1816
        %v1822 = vmul.f32 %v1821, %v781
        %v1823 = vmul.f32 %v1821, %v777
        %v1824 = vmul.f32 %v1821, %v782
        %v1825 = vadd.f32 %v1818, %v1822
        %v1826 = vadd.f32 %v1819, %v1823
        %v1827 = vadd.f32 %v1820, %v1824
        %1831 = vrot.lane.b32.xlu0 %v1825, 48
        %v1832 = vpop.permute.xlu0 %1831
        %1833 = vrot.lane.b32.xlu0 %v1826, 48
        %v1834 = vpop.permute.xlu0 %1833
        %1835 = vrot.lane.b32.xlu0 %v1827, 48
        %v1836 = vpop.permute.xlu0 %1835
        %v1837 = vsel %vm512, %v1832, %v1834
        %v1838 = vsel %vm512, %v1834, %v1836
        %v1841 = vadd.f32 %v1729, %v1837
        %v1842 = vadd.f32 %v1730, %v1838
        %s1843 = sld [smem:[#allocation2 + $0x28]]
        %s1844 = sld [smem:[#allocation2 + $0x59]]
        %v1845 = vstv %s1843
        %v1846 = vmul.f32 %v1845, %v641
        %v1847 = vmul.f32 %v1845, %v637
        %v1848 = vmul.f32 %v1845, %v642
        %v1849 = vstv %s1844
        %v1850 = vmul.f32 %v1849, %v805
        %v1851 = vmul.f32 %v1849, %v801
        %v1852 = vmul.f32 %v1849, %v806
        %v1853 = vadd.f32 %v1846, %v1850
        %v1854 = vadd.f32 %v1847, %v1851
        %v1855 = vadd.f32 %v1848, %v1852
        %1859 = vrot.lane.b32.xlu0 %v1853, 48
        %v1860 = vpop.permute.xlu0 %1859
        %1861 = vrot.lane.b32.xlu0 %v1854, 48
        %v1862 = vpop.permute.xlu0 %1861
        %1863 = vrot.lane.b32.xlu0 %v1855, 48
        %v1864 = vpop.permute.xlu0 %1863
        %v1865 = vsel %vm512, %v1860, %v1862
        %v1866 = vsel %vm512, %v1862, %v1864
        %v1869 = vadd.f32 %v1757, %v1865
        %v1870 = vadd.f32 %v1758, %v1866
        %s1871 = sld [smem:[#allocation2 + $0x29]]
        %s1872 = sld [smem:[#allocation2 + $0x5a]]
        %v1873 = vstv %s1871
        %v1874 = vmul.f32 %v1873, %v668
        %v1875 = vmul.f32 %v1873, %v664
        %v1876 = vmul.f32 %v1873, %v669
        %v1877 = vstv %s1872
        %v1878 = vmul.f32 %v1877, %v829
        %v1879 = vmul.f32 %v1877, %v825
        %v1880 = vmul.f32 %v1877, %v830
        %v1881 = vadd.f32 %v1874, %v1878
        %v1882 = vadd.f32 %v1875, %v1879
        %v1883 = vadd.f32 %v1876, %v1880
        %1887 = vrot.lane.b32.xlu0 %v1881, 48
        %v1888 = vpop.permute.xlu0 %1887
        %1889 = vrot.lane.b32.xlu0 %v1882, 48
        %v1890 = vpop.permute.xlu0 %1889
        %1891 = vrot.lane.b32.xlu0 %v1883, 48
        %v1892 = vpop.permute.xlu0 %1891
        %v1893 = vsel %vm512, %v1888, %v1890
        %v1894 = vsel %vm512, %v1890, %v1892
        %v1897 = vadd.f32 %v1785, %v1893
        %v1898 = vadd.f32 %v1786, %v1894
        %s1899 = sld [smem:[#allocation2 + $0x2a]]
        %s1900 = sld [smem:[#allocation2 + $0x5b]]
        %v1901 = vstv %s1899
        %v1902 = vmul.f32 %v1901, %v517
        %v1903 = vmul.f32 %v1901, %v513
        %v1904 = vmul.f32 %v1901, %v518
        %v1905 = vstv %s1900
        %v1906 = vmul.f32 %v1905, %v694
        %v1907 = vmul.f32 %v1905, %v690
        %v1908 = vmul.f32 %v1905, %v695
        %v1909 = vadd.f32 %v1902, %v1906
        %v1910 = vadd.f32 %v1903, %v1907
        %v1911 = vadd.f32 %v1904, %v1908
        %1915 = vrot.lane.b32.xlu0 %v1909, 32
        %v1916 = vpop.permute.xlu0 %1915
        %1917 = vrot.lane.b32.xlu0 %v1910, 32
        %v1918 = vpop.permute.xlu0 %1917
        %1919 = vrot.lane.b32.xlu0 %v1911, 32
        %v1920 = vpop.permute.xlu0 %1919
        %vm1921 = vcmask 261120
        %v1922 = vsel %vm1921, %v1916, %v1918
        %v1923 = vsel %vm1921, %v1918, %v1920
        %v1926 = vadd.f32 %v1813, %v1922
        %v1927 = vadd.f32 %v1814, %v1923
        %s1928 = sld [smem:[#allocation2 + $0x2b]]
        %s1929 = sld [smem:[#allocation2 + $0x5c]]
        %v1930 = vstv %s1928
        %v1931 = vmul.f32 %v1930, %v546
        %v1932 = vmul.f32 %v1930, %v542
        %v1933 = vmul.f32 %v1930, %v547
        %v1934 = vstv %s1929
        %v1935 = vmul.f32 %v1934, %v720
        %v1936 = vmul.f32 %v1934, %v716
        %v1937 = vmul.f32 %v1934, %v721
        %v1938 = vadd.f32 %v1931, %v1935
        %v1939 = vadd.f32 %v1932, %v1936
        %v1940 = vadd.f32 %v1933, %v1937
        %1944 = vrot.lane.b32.xlu0 %v1938, 32
        %v1945 = vpop.permute.xlu0 %1944
        %1946 = vrot.lane.b32.xlu0 %v1939, 32
        %v1947 = vpop.permute.xlu0 %1946
        %1948 = vrot.lane.b32.xlu0 %v1940, 32
        %v1949 = vpop.permute.xlu0 %1948
        %v1950 = vsel %vm1921, %v1945, %v1947
        %v1951 = vsel %vm1921, %v1947, %v1949
        %v1954 = vadd.f32 %v1841, %v1950
        %v1955 = vadd.f32 %v1842, %v1951
        %s1956 = sld [smem:[#allocation2 + $0x2c]]
        %s1957 = sld [smem:[#allocation2 + $0x5d]]
        %v1958 = vstv %s1956
        %v1959 = vmul.f32 %v1958, %v573
        %v1960 = vmul.f32 %v1958, %v569
        %v1961 = vmul.f32 %v1958, %v574
        %v1962 = vstv %s1957
        %v1963 = vmul.f32 %v1962, %v744
        %v1964 = vmul.f32 %v1962, %v740
        %v1965 = vmul.f32 %v1962, %v745
        %v1966 = vadd.f32 %v1959, %v1963
        %v1967 = vadd.f32 %v1960, %v1964
        %v1968 = vadd.f32 %v1961, %v1965
        %1972 = vrot.lane.b32.xlu0 %v1966, 32
        %v1973 = vpop.permute.xlu0 %1972
        %1974 = vrot.lane.b32.xlu0 %v1967, 32
        %v1975 = vpop.permute.xlu0 %1974
        %1976 = vrot.lane.b32.xlu0 %v1968, 32
        %v1977 = vpop.permute.xlu0 %1976
        %v1978 = vsel %vm1921, %v1973, %v1975
        %v1979 = vsel %vm1921, %v1975, %v1977
        %v1982 = vadd.f32 %v1869, %v1978
        %v1983 = vadd.f32 %v1870, %v1979
        %s1984 = sld [smem:[#allocation2 + $0x2d]]
        %s1985 = sld [smem:[#allocation2 + $0x5e]]
        %v1986 = vstv %s1984
        %v1987 = vmul.f32 %v1986, %v587
        %v1988 = vmul.f32 %v1986, %v582
        %v1989 = vmul.f32 %v1986, %v588
        %v1990 = vstv %s1985
        %v1991 = vmul.f32 %v1990, %v757
        %v1992 = vmul.f32 %v1990, %v752
        %v1993 = vmul.f32 %v1990, %v758
        %v1994 = vadd.f32 %v1987, %v1991
        %v1995 = vadd.f32 %v1988, %v1992
        %v1996 = vadd.f32 %v1989, %v1993
        %2000 = vrot.lane.b32.xlu0 %v1994, 32
        %v2001 = vpop.permute.xlu0 %2000
        %2002 = vrot.lane.b32.xlu0 %v1995, 32
        %v2003 = vpop.permute.xlu0 %2002
        %2004 = vrot.lane.b32.xlu0 %v1996, 32
        %v2005 = vpop.permute.xlu0 %2004
        %v2006 = vsel %vm1921, %v2001, %v2003
        %v2007 = vsel %vm1921, %v2003, %v2005
        %v2010 = vadd.f32 %v1897, %v2006
        %v2011 = vadd.f32 %v1898, %v2007
        %s2012 = sld [smem:[#allocation2 + $0x2e]]
        %s2013 = sld [smem:[#allocation2 + $0x5f]]
        %v2014 = vstv %s2012
        %v2015 = vmul.f32 %v2014, %v614
        %v2016 = vmul.f32 %v2014, %v610
        %v2017 = vmul.f32 %v2014, %v615
        %v2018 = vstv %s2013
        %v2019 = vmul.f32 %v2018, %v781
        %v2020 = vmul.f32 %v2018, %v777
        %v2021 = vmul.f32 %v2018, %v782
        %v2022 = vadd.f32 %v2015, %v2019
        %v2023 = vadd.f32 %v2016, %v2020
        %v2024 = vadd.f32 %v2017, %v2021
        %2028 = vrot.lane.b32.xlu0 %v2022, 32
        %v2029 = vpop.permute.xlu0 %2028
        %2030 = vrot.lane.b32.xlu0 %v2023, 32
        %v2031 = vpop.permute.xlu0 %2030
        %2032 = vrot.lane.b32.xlu0 %v2024, 32
        %v2033 = vpop.permute.xlu0 %2032
        %v2034 = vsel %vm1921, %v2029, %v2031
        %v2035 = vsel %vm1921, %v2031, %v2033
        %v2038 = vadd.f32 %v1926, %v2034
        %v2039 = vadd.f32 %v1927, %v2035
        %s2040 = sld [smem:[#allocation2 + $0x2f]]
        %s2041 = sld [smem:[#allocation2 + $0x60]]
        %v2042 = vstv %s2040
        %v2043 = vmul.f32 %v2042, %v641
        %v2044 = vmul.f32 %v2042, %v637
        %v2045 = vmul.f32 %v2042, %v642
        %v2046 = vstv %s2041
        %v2047 = vmul.f32 %v2046, %v805
        %v2048 = vmul.f32 %v2046, %v801
        %v2049 = vmul.f32 %v2046, %v806
        %v2050 = vadd.f32 %v2043, %v2047
        %v2051 = vadd.f32 %v2044, %v2048
        %v2052 = vadd.f32 %v2045, %v2049
        %2056 = vrot.lane.b32.xlu0 %v2050, 32
        %v2057 = vpop.permute.xlu0 %2056
        %2058 = vrot.lane.b32.xlu0 %v2051, 32
        %v2059 = vpop.permute.xlu0 %2058
        %2060 = vrot.lane.b32.xlu0 %v2052, 32
        %v2061 = vpop.permute.xlu0 %2060
        %v2062 = vsel %vm1921, %v2057, %v2059
        %v2063 = vsel %vm1921, %v2059, %v2061
        %v2066 = vadd.f32 %v1954, %v2062
        %v2067 = vadd.f32 %v1955, %v2063
        %s2068 = sld [smem:[#allocation2 + $0x30]]
        %s2069 = sld [smem:[#allocation2 + $0x61]]
        %v2070 = vstv %s2068
        %v2071 = vmul.f32 %v2070, %v668
        %v2072 = vmul.f32 %v2070, %v664
        %v2073 = vmul.f32 %v2070, %v669
        %v2074 = vstv %s2069
        %v2075 = vmul.f32 %v2074, %v829
        %v2076 = vmul.f32 %v2074, %v825
        %v2077 = vmul.f32 %v2074, %v830
        %v2078 = vadd.f32 %v2071, %v2075
        %v2079 = vadd.f32 %v2072, %v2076
        %v2080 = vadd.f32 %v2073, %v2077
        %2084 = vrot.lane.b32.xlu0 %v2078, 32
        %v2085 = vpop.permute.xlu0 %2084
        %2086 = vrot.lane.b32.xlu0 %v2079, 32
        %v2087 = vpop.permute.xlu0 %2086
        %2088 = vrot.lane.b32.xlu0 %v2080, 32
        %v2089 = vpop.permute.xlu0 %2088
        %v2090 = vsel %vm1921, %v2085, %v2087
        %v2091 = vsel %vm1921, %v2087, %v2089
        %v2094 = vadd.f32 %v1982, %v2090
        %v2095 = vadd.f32 %v1983, %v2091
        %v2096 = vadd.f32 %v2094, %v2010
        %v2097 = vadd.f32 %v2095, %v2011
        %v2098 = vadd.f32 %v2038, %v2066
        %v2099 = vadd.f32 %v2039, %v2067
        %v2100 = vadd.f32 %v2096, %v2098
        %v2101 = vadd.f32 %v2097, %v2099
        %v2102 = vxor.u32 %v2100, 2147483648
        %v2103 = vxor.u32 %v2101, 2147483648
        %v2104 = vmul.f32 %v2102, 1.442695
        %v2105 = vpow.pop %v2104
        %v2106 = vmul.f32 %v2103, 1.442695
        %v2107 = vpow.pop %v2106
        %v2108 = vadd.f32 %v2105, 1.0
        %v2109 = vadd.f32 %v2107, 1.0
        %v2110 = vrcp.pop %v2108
        %v2111 = vmul.f32 1.0, %v2110
        %v2112 = vrcp.pop %v2109
        %v2113 = vmul.f32 1.0, %v2112
        %v2114 = vlaneseq
        %v2115 = vshrl.u32 %v2114, 7
        %v2116 = vsub.s32 0, %v2115
        %v2117 = vrot.slane %v2111, %v2116
        %v2118 = vlaneseq
        %v2119 = vshrl.u32 %v2118, 7
        %v2120 = vsub.s32 0, %v2119
        %v2121 = vrot.slane %v2113, %v2120
        %v2122 = vmul.f32 %v415, %v2117
        %v2123 = vmul.f32 %v416, %v2121
        %v2124 = vmul.f32 %v417, %v2117
        %v2125 = vmul.f32 %v418, %v2121
        %v2126 = vmul.f32 %v419, %v2117
        %v2127 = vmul.f32 %v420, %v2121
        %v2128 = vmul.f32 %v421, %v2117
        %v2129 = vmul.f32 %v422, %v2121
        %2130 = vst [vmem:[%s204] sm:$0xff] %v2122
        %2131 = vst [vmem:[%s204 + $0x8] sm:$0xff] %v2123
        %2132 = vst [vmem:[%s204 + $0x10] sm:$0xff] %v2124
        %2133 = vst [vmem:[%s204 + $0x18] sm:$0xff] %v2125
        %2134 = vst [vmem:[%s204 + $0x20] sm:$0xff] %v2126
        %2135 = vst [vmem:[%s204 + $0x28] sm:$0xff] %v2127
        %2136 = vst [vmem:[%s204 + $0x30] sm:$0xff] %v2128
        %2137 = vst [vmem:[%s204 + $0x38] sm:$0xff] %v2129
        %s2138 = sand.u32 %s116, 1
        %s2139 = scalar_lea.sflag [#allocation3], %s2138
        %s2140 = sand.u32 %s116, 1
        %s2141 = smul.addr %s2140, 64
        %s2142 = scalar_lea.vmem [#allocation5], %s2141
        // Predicated region
        $region41: #{tpu_custom_call.1} parent=35 // pred_check
          %p2143 = pneg %p126
        $region42: #{tpu_custom_call.1} parent=35 // pred_check_branch
          %2145 = sbr.rel (%p2143) target = $region44
        $region43: #{tpu_custom_call.1} parent=35 // pred_region
          %s2147 = ssub.s32 1024, 1024
          %2148 = vsyncadd %s2139, %s2147
          %s2149 = smul.addr %s19, 8
          %s2150 = smul.addr %s2149, 128
          %s2151 = scalar_lea.hbm %s4, %s2150
          %s2152 = sshll.u32 %s2142, 4
          %s2153 = int_to_ptr.vmem [resolvable:$true] %s2152
          %2158 = dma.vmem_to_hbm [thread:$0]  %s2153, 1024, %s2151, %s2139, 256, 256, 16
        $region44: #{tpu_custom_call.1} parent=35 // pred_fallthru
          _
      $region36: #{tpu_custom_call.1} parent=5 // pred_fallthru
        _
      %p2159 = scmp.le.s32.totalorder 2, %s14
      // Predicated region
      $region45: #{tpu_custom_call.1} parent=5 // pred_check
        %p2160 = pneg %p2159
      $region46: #{tpu_custom_call.1} parent=5 // pred_check_branch
        %2162 = sbr.rel (%p2160) target = $region48
      $region47: #{tpu_custom_call.1} parent=5 // pred_region
        %s2163 = ssub.s32 %s14, 2
        // Predicated region
        $region49: #{tpu_custom_call.1} parent=47 // pred_check
          %p2164 = pneg %p132
        $region50: #{tpu_custom_call.1} parent=47 // pred_check_branch
          %2166 = sbr.rel (%p2164) target = $region52
        $region51: #{tpu_custom_call.1} parent=47 // pred_region
          %s2167 = sand.u32 %s117, 1
          %s2168 = scalar_lea.sflag [#allocation3], %s2167
          %s2169 = sand.u32 %s117, 1
          %s2170 = smul.addr %s2169, 64
          %s2171 = scalar_lea.vmem [#allocation5], %s2170
          %2172 = dma.done %s2168, 1024
        $region52: #{tpu_custom_call.1} parent=47 // pred_fallthru
          _
      $region48: #{tpu_custom_call.1} parent=5 // pred_fallthru
        _
    $region6: #{tpu_custom_call.1} parent=1 // loop_footer
      %s18 = sadd.s32 1, %s14
    $region7: #{tpu_custom_call.1} parent=1 // loop_footer_branch
      %13 = sbr.rel target = $region3
    $region8: #{tpu_custom_call.1} parent=1 // loop_exit
      _
    %2173 = vsyncpa [#allocation3], 1
    %s2174 = scalar_lea.sflag [#allocation3], 1
    %2175 = vsyncpa %s2174, 1
    %2176 = vsyncpa [#allocation4], 1
    %s2177 = scalar_lea.sflag [#allocation4], 1
    %2178 = vsyncpa %s2177, 1

</llo_original>
